<compile_context>
chip_gen: v7x
topology: tpu7x:2x2x1
jax: 0.10.0
libtpu: 0.0.40
codegen_flags: <defaults>
</compile_context>

<pallas_src>
import functools
import math

import jax
import jax.numpy as jnp
from jax.experimental import pallas as pl
from jax.experimental.pallas import tpu as pltpu


def _down_conv_kernel(ph_ref, w_ref, b_ref, o_ref, acc_ref, *, oh, ow, cin):
    """Fused 3x3 stride-2 conv + bias + ReLU for one (batch, Cout-block) step.

    ph_ref : (4, oh+1, ow+1, cin) bf16  -- 4 spatial phases of the padded input
    w_ref  : (9, cin, tn)         bf16  -- tap-major weights, resident in VMEM
    b_ref  : (1, tn)              f32
    o_ref  : (1, oh*ow, tn)       f32
    acc_ref: (oh*ow, tn)          f32   -- VMEM accumulator
    """
    acc_ref[...] = jnp.zeros_like(acc_ref)
    for ky in range(3):
        for kx in range(3):
            p = (ky % 2) * 2 + (kx % 2)          # phase holding this tap
            dy, dx = ky // 2, kx // 2            # static window offset in phase
            win = ph_ref[p, dy:dy + oh, dx:dx + ow, :]         # (oh, ow, cin)
            a = win.reshape(oh * ow, cin)                      # merge leading dims
            acc_ref[...] += jnp.dot(a, w_ref[3 * ky + kx],
                                    preferred_element_type=jnp.float32)
    o_ref[0] = jnp.maximum(acc_ref[...] + b_ref[...], 0.0).astype(o_ref.dtype)


def down_forward(w, b, x_nchw):
    """PyTorch Down: Conv2d(in, out, 3, stride=2, padding=1) + ReLU. NCHW in/out."""
    cout, cin, kh, kw = w.shape
    assert (kh, kw) == (3, 3)
    n, _, h, wdt = x_nchw.shape
    oh, ow = (h + 1) // 2, (wdt + 1) // 2

    # --- one-pass restructuring in XLA (no 9x im2col blow-up) ----------------
    x = jnp.transpose(x_nchw, (0, 2, 3, 1))                          # NHWC
    xp = jnp.pad(x, ((0, 0), (1, 1 + h % 2), (1, 1 + wdt % 2), (0, 0)))
    phases = jnp.stack(
        [xp[:, 0::2, 0::2, :], xp[:, 0::2, 1::2, :],
         xp[:, 1::2, 0::2, :], xp[:, 1::2, 1::2, :]], axis=1)        # (N,4,OH+1,OW+1,C)
    phases = phases.reshape(n * 4, oh + 1, ow + 1, cin).astype(jnp.bfloat16)

    # tap-major weight (9, Cin, Cout) in bf16 for the MXU; bias stays f32
    w_taps = jnp.transpose(w, (2, 3, 1, 0)).reshape(9, cin, cout).astype(jnp.bfloat16)
    bias = b.reshape(1, cout).astype(jnp.float32)

    # Cout blocking: full width unless it is a large multiple of 128.
    tn = 128 if (cout > 128 and cout % 128 == 0) else cout
    ncb = cout // tn

    # VMEM budget: double-buffered in/out blocks + resident weights + acc.
    ph_blk = 4 * (oh + 1) * (ow + 1) * cin * 2
    out_blk = oh * ow * tn * 4
    est = 2 * (ph_blk + out_blk) + 9 * cin * cout * 2 + 4 * cout + out_blk + (2 << 20)
    vmem_limit = int(min(max(est, 16 << 20), 48 << 20))

    kernel = functools.partial(_down_conv_kernel, oh=oh, ow=ow, cin=cin)
    out_flat = pl.pallas_call(
        kernel,
        out_shape=jax.ShapeDtypeStruct((n, oh * ow, cout), jnp.float32),
        grid_spec=pltpu.PrefetchScalarGridSpec(
            num_scalar_prefetch=0,
            grid=(n, ncb),
            in_specs=[
                pl.BlockSpec((4, oh + 1, ow + 1, cin), lambda i, j: (i, 0, 0, 0)),
                pl.BlockSpec((9, cin, tn), lambda i, j: (0, 0, j)),
                pl.BlockSpec((1, tn), lambda i, j: (0, j)),
            ],
            out_specs=pl.BlockSpec((1, oh * ow, tn), lambda i, j: (i, 0, j)),
            scratch_shapes=[pltpu.VMEM((oh * ow, tn), jnp.float32)],
        ),
        compiler_params=pltpu.CompilerParams(
            dimension_semantics=("parallel", "parallel"),
            vmem_limit_bytes=vmem_limit),
    )(phases, w_taps, bias)

    out = out_flat.reshape(n, oh, ow, cout)
    return jnp.transpose(out, (0, 3, 1, 2))                          # back to NCHW


if __name__ == "__main__":
    key = jax.random.PRNGKey(0)
    kw_, kb_, kx_ = jax.random.split(key, 3)
    in_ch, out_ch = 4, 32
    batch, hw = 2, 16
    fan_in = in_ch * 9
    bound = 1.0 / math.sqrt(fan_in)
    w = jax.random.uniform(kw_, (out_ch, in_ch, 3, 3), jnp.float32, -bound, bound)
    b = jax.random.uniform(kb_, (out_ch,), jnp.float32, -bound, bound)
    x = jax.random.normal(kx_, (batch, in_ch, hw, hw), jnp.float32)

    out = jax.jit(down_forward)(w, b, x)
    jax.block_until_ready(out)
    assert out.shape == (batch, out_ch, hw // 2, hw // 2), out.shape

    # numerics check vs plain-XLA f32 reference (bf16 MXU operands -> loose tol)
    ref = jax.lax.conv_general_dilated(
        x, w, window_strides=(2, 2), padding=((1, 1), (1, 1)),
        dimension_numbers=("NCHW", "OIHW", "NCHW"))
    ref = jnp.maximum(ref + b[None, :, None, None], 0.0)
    err = float(jnp.max(jnp.abs(out - ref)))
    assert err < 1e-1, f"max abs err {err}"
    print("KERNEL_OK")
</pallas_src>

<mosaic_0001>
module attributes {stable_mosaic.version = 11 : i64} {
  func.func @_down_conv_kernel(%arg0: i32, %arg1: i32, %arg2: memref<4x9x9x4xbf16, #tpu.memory_space<vmem>>, %arg3: memref<9x4x32xbf16, #tpu.memory_space<vmem>>, %arg4: memref<1x32xf32, #tpu.memory_space<vmem>>, %arg5: memref<1x64x32xf32, #tpu.memory_space<vmem>>, %arg6: memref<64x32xf32, #tpu.memory_space<vmem>>) attributes {dimension_semantics = [#tpu.dimension_semantics<parallel>, #tpu.dimension_semantics<parallel>], iteration_bounds = array<i64: 2, 1>, scalar_prefetch = 0 : i64, scratch_operands = 1 : i64, tpu.core_type = #tpu.core_type<tc>, window_params = [{transform_indices = @transform_0, window_bounds = array<i64: 4, 9, 9, 4>}, {transform_indices = @transform_1, window_bounds = array<i64: 9, 4, 32>}, {transform_indices = @transform_2, window_bounds = array<i64: 1, 32>}, {transform_indices = @transform_3, window_bounds = array<i64: 1, 64, 32>}]} {
    %cst = arith.constant 0.000000e+00 : f32
    %0 = vector.broadcast %cst : f32 to vector<64x32xf32>
    %c0 = arith.constant 0 : index
    %c0_0 = arith.constant 0 : index
    %1 = vector.load %arg6[%c0, %c0_0] : memref<64x32xf32, #tpu.memory_space<vmem>>, vector<64x32xf32>
    tpu.vector_store %arg6[%c0, %c0_0], %0 {strides = array<i32>} : memref<64x32xf32, #tpu.memory_space<vmem>>, vector<64x32xf32>,
    %c0_1 = arith.constant 0 : index
    %c0_2 = arith.constant 0 : index
    %c0_3 = arith.constant 0 : index
    %c0_4 = arith.constant 0 : index
    %2 = vector.load %arg2[%c0_1, %c0_2, %c0_3, %c0_4] : memref<4x9x9x4xbf16, #tpu.memory_space<vmem>>, vector<1x8x8x4xbf16>
    %3 = vector.shape_cast %2 : vector<1x8x8x4xbf16> to vector<8x8x4xbf16>
    %4 = vector.shape_cast %3 : vector<8x8x4xbf16> to vector<64x4xbf16>
    %c0_5 = arith.constant 0 : index
    %c0_6 = arith.constant 0 : index
    %5 = vector.load %arg6[%c0_5, %c0_6] : memref<64x32xf32, #tpu.memory_space<vmem>>, vector<64x32xf32>
    %c0_7 = arith.constant 0 : index
    %c0_8 = arith.constant 0 : index
    %c0_9 = arith.constant 0 : index
    %6 = vector.load %arg3[%c0_7, %c0_8, %c0_9] : memref<9x4x32xbf16, #tpu.memory_space<vmem>>, vector<1x4x32xbf16>
    %7 = vector.shape_cast %6 : vector<1x4x32xbf16> to vector<4x32xbf16>
    %cst_10 = arith.constant dense<0.000000e+00> : vector<64x32xf32>
    %8 = tpu.matmul %4, %7, %cst_10 {dimension_numbers = #tpu.dot_dimension_numbers<[1], [0], [0], [1], [0, 0, 1, 1], [], []>} : vector<64x4xbf16>, vector<4x32xbf16>, vector<64x32xf32> -> vector<64x32xf32>
    %9 = arith.addf %5, %8 : vector<64x32xf32>
    %c0_11 = arith.constant 0 : index
    %c0_12 = arith.constant 0 : index
    %10 = vector.load %arg6[%c0_11, %c0_12] : memref<64x32xf32, #tpu.memory_space<vmem>>, vector<64x32xf32>
    tpu.vector_store %arg6[%c0_11, %c0_12], %9 {strides = array<i32>} : memref<64x32xf32, #tpu.memory_space<vmem>>, vector<64x32xf32>,
    %c1 = arith.constant 1 : index
    %c0_13 = arith.constant 0 : index
    %c0_14 = arith.constant 0 : index
    %c0_15 = arith.constant 0 : index
    %11 = vector.load %arg2[%c1, %c0_13, %c0_14, %c0_15] : memref<4x9x9x4xbf16, #tpu.memory_space<vmem>>, vector<1x8x8x4xbf16>
    %12 = vector.shape_cast %11 : vector<1x8x8x4xbf16> to vector<8x8x4xbf16>
    %13 = vector.shape_cast %12 : vector<8x8x4xbf16> to vector<64x4xbf16>
    %c0_16 = arith.constant 0 : index
    %c0_17 = arith.constant 0 : index
    %14 = vector.load %arg6[%c0_16, %c0_17] : memref<64x32xf32, #tpu.memory_space<vmem>>, vector<64x32xf32>
    %c1_18 = arith.constant 1 : index
    %c0_19 = arith.constant 0 : index
    %c0_20 = arith.constant 0 : index
    %15 = vector.load %arg3[%c1_18, %c0_19, %c0_20] : memref<9x4x32xbf16, #tpu.memory_space<vmem>>, vector<1x4x32xbf16>
    %16 = vector.shape_cast %15 : vector<1x4x32xbf16> to vector<4x32xbf16>
    %cst_21 = arith.constant dense<0.000000e+00> : vector<64x32xf32>
    %17 = tpu.matmul %13, %16, %cst_21 {dimension_numbers = #tpu.dot_dimension_numbers<[1], [0], [0], [1], [0, 0, 1, 1], [], []>} : vector<64x4xbf16>, vector<4x32xbf16>, vector<64x32xf32> -> vector<64x32xf32>
    %18 = arith.addf %14, %17 : vector<64x32xf32>
    %c0_22 = arith.constant 0 : index
    %c0_23 = arith.constant 0 : index
    %19 = vector.load %arg6[%c0_22, %c0_23] : memref<64x32xf32, #tpu.memory_space<vmem>>, vector<64x32xf32>
    tpu.vector_store %arg6[%c0_22, %c0_23], %18 {strides = array<i32>} : memref<64x32xf32, #tpu.memory_space<vmem>>, vector<64x32xf32>,
    %c0_24 = arith.constant 0 : index
    %c0_25 = arith.constant 0 : index
    %c1_26 = arith.constant 1 : index
    %c0_27 = arith.constant 0 : index
    %20 = vector.load %arg2[%c0_24, %c0_25, %c1_26, %c0_27] : memref<4x9x9x4xbf16, #tpu.memory_space<vmem>>, vector<1x8x8x4xbf16>
    %21 = vector.shape_cast %20 : vector<1x8x8x4xbf16> to vector<8x8x4xbf16>
    %22 = vector.shape_cast %21 : vector<8x8x4xbf16> to vector<64x4xbf16>
    %c0_28 = arith.constant 0 : index
    %c0_29 = arith.constant 0 : index
    %23 = vector.load %arg6[%c0_28, %c0_29] : memref<64x32xf32, #tpu.memory_space<vmem>>, vector<64x32xf32>
    %c2 = arith.constant 2 : index
    %c0_30 = arith.constant 0 : index
    %c0_31 = arith.constant 0 : index
    %24 = vector.load %arg3[%c2, %c0_30, %c0_31] : memref<9x4x32xbf16, #tpu.memory_space<vmem>>, vector<1x4x32xbf16>
    %25 = vector.shape_cast %24 : vector<1x4x32xbf16> to vector<4x32xbf16>
    %cst_32 = arith.constant dense<0.000000e+00> : vector<64x32xf32>
    %26 = tpu.matmul %22, %25, %cst_32 {dimension_numbers = #tpu.dot_dimension_numbers<[1], [0], [0], [1], [0, 0, 1, 1], [], []>} : vector<64x4xbf16>, vector<4x32xbf16>, vector<64x32xf32> -> vector<64x32xf32>
    %27 = arith.addf %23, %26 : vector<64x32xf32>
    %c0_33 = arith.constant 0 : index
    %c0_34 = arith.constant 0 : index
    %28 = vector.load %arg6[%c0_33, %c0_34] : memref<64x32xf32, #tpu.memory_space<vmem>>, vector<64x32xf32>
    tpu.vector_store %arg6[%c0_33, %c0_34], %27 {strides = array<i32>} : memref<64x32xf32, #tpu.memory_space<vmem>>, vector<64x32xf32>,
    %c2_35 = arith.constant 2 : index
    %c0_36 = arith.constant 0 : index
    %c0_37 = arith.constant 0 : index
    %c0_38 = arith.constant 0 : index
    %29 = vector.load %arg2[%c2_35, %c0_36, %c0_37, %c0_38] : memref<4x9x9x4xbf16, #tpu.memory_space<vmem>>, vector<1x8x8x4xbf16>
    %30 = vector.shape_cast %29 : vector<1x8x8x4xbf16> to vector<8x8x4xbf16>
    %31 = vector.shape_cast %30 : vector<8x8x4xbf16> to vector<64x4xbf16>
    %c0_39 = arith.constant 0 : index
    %c0_40 = arith.constant 0 : index
    %32 = vector.load %arg6[%c0_39, %c0_40] : memref<64x32xf32, #tpu.memory_space<vmem>>, vector<64x32xf32>
    %c3 = arith.constant 3 : index
    %c0_41 = arith.constant 0 : index
    %c0_42 = arith.constant 0 : index
    %33 = vector.load %arg3[%c3, %c0_41, %c0_42] : memref<9x4x32xbf16, #tpu.memory_space<vmem>>, vector<1x4x32xbf16>
    %34 = vector.shape_cast %33 : vector<1x4x32xbf16> to vector<4x32xbf16>
    %cst_43 = arith.constant dense<0.000000e+00> : vector<64x32xf32>
    %35 = tpu.matmul %31, %34, %cst_43 {dimension_numbers = #tpu.dot_dimension_numbers<[1], [0], [0], [1], [0, 0, 1, 1], [], []>} : vector<64x4xbf16>, vector<4x32xbf16>, vector<64x32xf32> -> vector<64x32xf32>
    %36 = arith.addf %32, %35 : vector<64x32xf32>
    %c0_44 = arith.constant 0 : index
    %c0_45 = arith.constant 0 : index
    %37 = vector.load %arg6[%c0_44, %c0_45] : memref<64x32xf32, #tpu.memory_space<vmem>>, vector<64x32xf32>
    tpu.vector_store %arg6[%c0_44, %c0_45], %36 {strides = array<i32>} : memref<64x32xf32, #tpu.memory_space<vmem>>, vector<64x32xf32>,
    %c3_46 = arith.constant 3 : index
    %c0_47 = arith.constant 0 : index
    %c0_48 = arith.constant 0 : index
    %c0_49 = arith.constant 0 : index
    %38 = vector.load %arg2[%c3_46, %c0_47, %c0_48, %c0_49] : memref<4x9x9x4xbf16, #tpu.memory_space<vmem>>, vector<1x8x8x4xbf16>
    %39 = vector.shape_cast %38 : vector<1x8x8x4xbf16> to vector<8x8x4xbf16>
    %40 = vector.shape_cast %39 : vector<8x8x4xbf16> to vector<64x4xbf16>
    %c0_50 = arith.constant 0 : index
    %c0_51 = arith.constant 0 : index
    %41 = vector.load %arg6[%c0_50, %c0_51] : memref<64x32xf32, #tpu.memory_space<vmem>>, vector<64x32xf32>
    %c4 = arith.constant 4 : index
    %c0_52 = arith.constant 0 : index
    %c0_53 = arith.constant 0 : index
    %42 = vector.load %arg3[%c4, %c0_52, %c0_53] : memref<9x4x32xbf16, #tpu.memory_space<vmem>>, vector<1x4x32xbf16>
    %43 = vector.shape_cast %42 : vector<1x4x32xbf16> to vector<4x32xbf16>
    %cst_54 = arith.constant dense<0.000000e+00> : vector<64x32xf32>
    %44 = tpu.matmul %40, %43, %cst_54 {dimension_numbers = #tpu.dot_dimension_numbers<[1], [0], [0], [1], [0, 0, 1, 1], [], []>} : vector<64x4xbf16>, vector<4x32xbf16>, vector<64x32xf32> -> vector<64x32xf32>
    %45 = arith.addf %41, %44 : vector<64x32xf32>
    %c0_55 = arith.constant 0 : index
    %c0_56 = arith.constant 0 : index
    %46 = vector.load %arg6[%c0_55, %c0_56] : memref<64x32xf32, #tpu.memory_space<vmem>>, vector<64x32xf32>
    tpu.vector_store %arg6[%c0_55, %c0_56], %45 {strides = array<i32>} : memref<64x32xf32, #tpu.memory_space<vmem>>, vector<64x32xf32>,
    %c2_57 = arith.constant 2 : index
    %c0_58 = arith.constant 0 : index
    %c1_59 = arith.constant 1 : index
    %c0_60 = arith.constant 0 : index
    %47 = vector.load %arg2[%c2_57, %c0_58, %c1_59, %c0_60] : memref<4x9x9x4xbf16, #tpu.memory_space<vmem>>, vector<1x8x8x4xbf16>
    %48 = vector.shape_cast %47 : vector<1x8x8x4xbf16> to vector<8x8x4xbf16>
    %49 = vector.shape_cast %48 : vector<8x8x4xbf16> to vector<64x4xbf16>
    %c0_61 = arith.constant 0 : index
    %c0_62 = arith.constant 0 : index
    %50 = vector.load %arg6[%c0_61, %c0_62] : memref<64x32xf32, #tpu.memory_space<vmem>>, vector<64x32xf32>
    %c5 = arith.constant 5 : index
    %c0_63 = arith.constant 0 : index
    %c0_64 = arith.constant 0 : index
    %51 = vector.load %arg3[%c5, %c0_63, %c0_64] : memref<9x4x32xbf16, #tpu.memory_space<vmem>>, vector<1x4x32xbf16>
    %52 = vector.shape_cast %51 : vector<1x4x32xbf16> to vector<4x32xbf16>
    %cst_65 = arith.constant dense<0.000000e+00> : vector<64x32xf32>
    %53 = tpu.matmul %49, %52, %cst_65 {dimension_numbers = #tpu.dot_dimension_numbers<[1], [0], [0], [1], [0, 0, 1, 1], [], []>} : vector<64x4xbf16>, vector<4x32xbf16>, vector<64x32xf32> -> vector<64x32xf32>
    %54 = arith.addf %50, %53 : vector<64x32xf32>
    %c0_66 = arith.constant 0 : index
    %c0_67 = arith.constant 0 : index
    %55 = vector.load %arg6[%c0_66, %c0_67] : memref<64x32xf32, #tpu.memory_space<vmem>>, vector<64x32xf32>
    tpu.vector_store %arg6[%c0_66, %c0_67], %54 {strides = array<i32>} : memref<64x32xf32, #tpu.memory_space<vmem>>, vector<64x32xf32>,
    %c0_68 = arith.constant 0 : index
    %c1_69 = arith.constant 1 : index
    %c0_70 = arith.constant 0 : index
    %c0_71 = arith.constant 0 : index
    %56 = vector.load %arg2[%c0_68, %c1_69, %c0_70, %c0_71] : memref<4x9x9x4xbf16, #tpu.memory_space<vmem>>, vector<1x8x8x4xbf16>
    %57 = vector.shape_cast %56 : vector<1x8x8x4xbf16> to vector<8x8x4xbf16>
    %58 = vector.shape_cast %57 : vector<8x8x4xbf16> to vector<64x4xbf16>
    %c0_72 = arith.constant 0 : index
    %c0_73 = arith.constant 0 : index
    %59 = vector.load %arg6[%c0_72, %c0_73] : memref<64x32xf32, #tpu.memory_space<vmem>>, vector<64x32xf32>
    %c6 = arith.constant 6 : index
    %c0_74 = arith.constant 0 : index
    %c0_75 = arith.constant 0 : index
    %60 = vector.load %arg3[%c6, %c0_74, %c0_75] : memref<9x4x32xbf16, #tpu.memory_space<vmem>>, vector<1x4x32xbf16>
    %61 = vector.shape_cast %60 : vector<1x4x32xbf16> to vector<4x32xbf16>
    %cst_76 = arith.constant dense<0.000000e+00> : vector<64x32xf32>
    %62 = tpu.matmul %58, %61, %cst_76 {dimension_numbers = #tpu.dot_dimension_numbers<[1], [0], [0], [1], [0, 0, 1, 1], [], []>} : vector<64x4xbf16>, vector<4x32xbf16>, vector<64x32xf32> -> vector<64x32xf32>
    %63 = arith.addf %59, %62 : vector<64x32xf32>
    %c0_77 = arith.constant 0 : index
    %c0_78 = arith.constant 0 : index
    %64 = vector.load %arg6[%c0_77, %c0_78] : memref<64x32xf32, #tpu.memory_space<vmem>>, vector<64x32xf32>
    tpu.vector_store %arg6[%c0_77, %c0_78], %63 {strides = array<i32>} : memref<64x32xf32, #tpu.memory_space<vmem>>, vector<64x32xf32>,
    %c1_79 = arith.constant 1 : index
    %c1_80 = arith.constant 1 : index
    %c0_81 = arith.constant 0 : index
    %c0_82 = arith.constant 0 : index
    %65 = vector.load %arg2[%c1_79, %c1_80, %c0_81, %c0_82] : memref<4x9x9x4xbf16, #tpu.memory_space<vmem>>, vector<1x8x8x4xbf16>
    %66 = vector.shape_cast %65 : vector<1x8x8x4xbf16> to vector<8x8x4xbf16>
    %67 = vector.shape_cast %66 : vector<8x8x4xbf16> to vector<64x4xbf16>
    %c0_83 = arith.constant 0 : index
    %c0_84 = arith.constant 0 : index
    %68 = vector.load %arg6[%c0_83, %c0_84] : memref<64x32xf32, #tpu.memory_space<vmem>>, vector<64x32xf32>
    %c7 = arith.constant 7 : index
    %c0_85 = arith.constant 0 : index
    %c0_86 = arith.constant 0 : index
    %69 = vector.load %arg3[%c7, %c0_85, %c0_86] : memref<9x4x32xbf16, #tpu.memory_space<vmem>>, vector<1x4x32xbf16>
    %70 = vector.shape_cast %69 : vector<1x4x32xbf16> to vector<4x32xbf16>
    %cst_87 = arith.constant dense<0.000000e+00> : vector<64x32xf32>
    %71 = tpu.matmul %67, %70, %cst_87 {dimension_numbers = #tpu.dot_dimension_numbers<[1], [0], [0], [1], [0, 0, 1, 1], [], []>} : vector<64x4xbf16>, vector<4x32xbf16>, vector<64x32xf32> -> vector<64x32xf32>
    %72 = arith.addf %68, %71 : vector<64x32xf32>
    %c0_88 = arith.constant 0 : index
    %c0_89 = arith.constant 0 : index
    %73 = vector.load %arg6[%c0_88, %c0_89] : memref<64x32xf32, #tpu.memory_space<vmem>>, vector<64x32xf32>
    tpu.vector_store %arg6[%c0_88, %c0_89], %72 {strides = array<i32>} : memref<64x32xf32, #tpu.memory_space<vmem>>, vector<64x32xf32>,
    %c0_90 = arith.constant 0 : index
    %c1_91 = arith.constant 1 : index
    %c1_92 = arith.constant 1 : index
    %c0_93 = arith.constant 0 : index
    %74 = vector.load %arg2[%c0_90, %c1_91, %c1_92, %c0_93] : memref<4x9x9x4xbf16, #tpu.memory_space<vmem>>, vector<1x8x8x4xbf16>
    %75 = vector.shape_cast %74 : vector<1x8x8x4xbf16> to vector<8x8x4xbf16>
    %76 = vector.shape_cast %75 : vector<8x8x4xbf16> to vector<64x4xbf16>
    %c0_94 = arith.constant 0 : index
    %c0_95 = arith.constant 0 : index
    %77 = vector.load %arg6[%c0_94, %c0_95] : memref<64x32xf32, #tpu.memory_space<vmem>>, vector<64x32xf32>
    %c8 = arith.constant 8 : index
    %c0_96 = arith.constant 0 : index
    %c0_97 = arith.constant 0 : index
    %78 = vector.load %arg3[%c8, %c0_96, %c0_97] : memref<9x4x32xbf16, #tpu.memory_space<vmem>>, vector<1x4x32xbf16>
    %79 = vector.shape_cast %78 : vector<1x4x32xbf16> to vector<4x32xbf16>
    %cst_98 = arith.constant dense<0.000000e+00> : vector<64x32xf32>
    %80 = tpu.matmul %76, %79, %cst_98 {dimension_numbers = #tpu.dot_dimension_numbers<[1], [0], [0], [1], [0, 0, 1, 1], [], []>} : vector<64x4xbf16>, vector<4x32xbf16>, vector<64x32xf32> -> vector<64x32xf32>
    %81 = arith.addf %77, %80 : vector<64x32xf32>
    %c0_99 = arith.constant 0 : index
    %c0_100 = arith.constant 0 : index
    %82 = vector.load %arg6[%c0_99, %c0_100] : memref<64x32xf32, #tpu.memory_space<vmem>>, vector<64x32xf32>
    tpu.vector_store %arg6[%c0_99, %c0_100], %81 {strides = array<i32>} : memref<64x32xf32, #tpu.memory_space<vmem>>, vector<64x32xf32>,
    %c0_101 = arith.constant 0 : index
    %c0_102 = arith.constant 0 : index
    %83 = vector.load %arg6[%c0_101, %c0_102] : memref<64x32xf32, #tpu.memory_space<vmem>>, vector<64x32xf32>
    %c0_103 = arith.constant 0 : index
    %c0_104 = arith.constant 0 : index
    %84 = vector.load %arg4[%c0_103, %c0_104] : memref<1x32xf32, #tpu.memory_space<vmem>>, vector<1x32xf32>
    %85 = vector.broadcast %84 : vector<1x32xf32> to vector<64x32xf32>
    %86 = arith.addf %83, %85 : vector<64x32xf32>
    %cst_105 = arith.constant 0.000000e+00 : f32
    %87 = vector.broadcast %cst_105 : f32 to vector<64x32xf32>
    %88 = arith.maximumf %86, %87 : vector<64x32xf32>
    %c0_106 = arith.constant 0 : index
    %c0_107 = arith.constant 0 : index
    %c0_108 = arith.constant 0 : index
    %89 = vector.load %arg5[%c0_106, %c0_107, %c0_108] : memref<1x64x32xf32, #tpu.memory_space<vmem>>, vector<1x64x32xf32>
    %90 = vector.shape_cast %89 : vector<1x64x32xf32> to vector<64x32xf32>
    %91 = vector.shape_cast %88 : vector<64x32xf32> to vector<1x64x32xf32>
    tpu.vector_store %arg5[%c0_106, %c0_107, %c0_108], %91 {strides = array<i32>} : memref<1x64x32xf32, #tpu.memory_space<vmem>>, vector<1x64x32xf32>,
    return
  }
  func.func @transform_0(%arg0: i32, %arg1: i32) -> (i32, i32, i32, i32) {
    %c0_i32 = arith.constant 0 : i32
    %c0_i32_0 = arith.constant 0 : i32
    %c0_i32_1 = arith.constant 0 : i32
    %c0_i32_2 = arith.constant 0 : i32
    return %arg0, %c0_i32, %c0_i32_0, %c0_i32_1 : i32, i32, i32, i32
  }
  func.func @transform_1(%arg0: i32, %arg1: i32) -> (i32, i32, i32) {
    %c0_i32 = arith.constant 0 : i32
    %c0_i32_0 = arith.constant 0 : i32
    %c0_i32_1 = arith.constant 0 : i32
    return %c0_i32, %c0_i32_0, %arg1 : i32, i32, i32
  }
  func.func @transform_2(%arg0: i32, %arg1: i32) -> (i32, i32) {
    %c0_i32 = arith.constant 0 : i32
    %c0_i32_0 = arith.constant 0 : i32
    return %c0_i32, %arg1 : i32, i32
  }
  func.func @transform_3(%arg0: i32, %arg1: i32) -> (i32, i32, i32) {
    %c0_i32 = arith.constant 0 : i32
    %c0_i32_0 = arith.constant 0 : i32
    return %arg0, %c0_i32, %arg1 : i32, i32, i32
  }
}

</mosaic_0001>

<llo_original>
// kernel: down_forward.1
$region0: #{down_forward.1}
  #allocation0 [shape = 'u32[]', space=smem, size = 0x4, offset = 0x4, fixed_abs, tag = 'smem constant byte address 0x4 - core index']
  #allocation1 [shape = 'u32[144,128]{1,0:T(1,128)}', space=vmem, size = 0x12000, scoped, tag = 'internal scratch']
  #allocation2 [shape = 'f32[64,32]{1,0:T(8,128)}', space=vmem, size = 0x8000, scoped, tag = 'scratch operand']
  %s0 = inlined_call_operand.vmem [shape: bf16[8,9,9,4], index: 0, kind: input, shape index: {}]
  %s1 = inlined_call_operand.vmem [shape: bf16[9,4,32], index: 1, kind: input, shape index: {}]
  %s2 = inlined_call_operand.vmem [shape: f32[1,32], index: 2, kind: input, shape index: {}]
  %s3 = inlined_call_operand.hbm [shape: f32[2,64,32], index: 3, kind: output, shape index: {}]
  %s4 = sld [smem:[#allocation0]]
  $region45: #{down_forward.1} parent=0
    _
  %s6 = ssub.s32 1, %s4
  %s7 = scalar_select 0, %s6, %s4
  $region1: #{down_forward.1} parent=0
    #allocation3 [shape = 'u8[65536]{0}', space=vmem, size = 0x10000, scoped, tag = 'output window, operand 0']
    #allocation4 [shape = 's32[2]{0}', space=sflag, size = 0x8, scoped, tag = 'scoped memory for down_forward.1']
    %8 = vsyncpa [#allocation4], 0
    %s9 = scalar_lea.sflag [#allocation4], 1
    %10 = vsyncpa %s9, 0
    loop: start=0, step=1, limit=4
    $region2: #{down_forward.1} parent=1 // loop_pre_header
      _
    $region3: #{down_forward.1} parent=1 // loop_header
      %s12 = sphi 0, %s16
      %p13 = scmp.ge.s32.totalorder %s12, 4
      %s19 = sphi 0, %s31
      %s20 = sphi 0, %s27
      %s21 = sphi 0, %s19
      %s22 = sphi 0, %s20
      %s23 = sphi 0, %s21
      %s24 = sphi 0, %s22
      %s34 = sphi 0, %s36
      %s37 = sphi 0, %s34
      %s38 = sphi 0, %s37
      %s54 = sphi 0, %s38
      %s60 = sphi 0, %s62
      %s63 = sphi 0, %s60
      %s64 = sphi 0, %s63
      %s80 = sphi 0, %s64
      %s86 = sphi 0, %s88
      %s89 = sphi 0, %s86
      %s90 = sphi 0, %s89
      %s106 = sphi 0, %s90
      %s114 = sphi 0, %s116
      %s117 = sphi 0, %s114
      %s118 = sphi 0, %s117
      %s134 = sphi 0, %s118
    $region4: #{down_forward.1} parent=1 // loop_header_branch
      %15 = sbr.rel (%p13) target = $region8
    $region5: #{down_forward.1} parent=1 // loop_body
      %s17 = ssub.s32 %s12, 1
      %s18 = ssub.s32 %s12, 2
      %s25 = sadd.s32 1, %s20
      %p26 = scmp.ge.s32.totalorder %s25, 1
      %s27 = scalar_select %p26, 0, %s25
      %s28 = sadd.s32 1, %s19
      %s29 = scalar_select %p26, %s28, %s19
      %p30 = scmp.ge.s32.totalorder %s29, 2
      %s31 = scalar_select %p30, 0, %s29
      %s32 = ssub.s32 %s19, %s31
      %p33 = scmp.eq.s32.totalorder %s32, 0
      %s35 = sadd.s32 %s34, 1
      %s36 = scalar_select %p33, %s34, %s35
      %p39 = pneg %p33
      %p40 = scmp.eq.s32.totalorder %s12, 1
      %p41 = por %p39, %p40
      %p42 = scmp.ne.s32.totalorder %s34, %s37
      %p43 = scmp.eq.s32.totalorder %s12, 0
      %p44 = por %p42, %p43
      %p45 = scmp.ne.s32.totalorder %s34, %s37
      %p46 = scmp.eq.s32.totalorder %s17, 1
      %p47 = por %p45, %p46
      %p48 = scmp.ne.s32.totalorder %s37, %s38
      %p49 = scmp.eq.s32.totalorder %s17, 0
      %p50 = por %p48, %p49
      %p51 = scmp.ne.s32.totalorder %s37, %s38
      %p52 = scmp.eq.s32.totalorder %s18, 1
      %p53 = por %p51, %p52
      %p55 = scmp.ne.s32.totalorder %s38, %s54
      %p56 = scmp.eq.s32.totalorder %s18, 0
      %p57 = por %p55, %p56
      %s58 = ssub.s32 %s20, %s27
      %p59 = scmp.eq.s32.totalorder %s58, 0
      %s61 = sadd.s32 %s60, 1
      %s62 = scalar_select %p59, %s60, %s61
      %p65 = pneg %p59
      %p66 = scmp.eq.s32.totalorder %s12, 1
      %p67 = por %p65, %p66
      %p68 = scmp.ne.s32.totalorder %s60, %s63
      %p69 = scmp.eq.s32.totalorder %s12, 0
      %p70 = por %p68, %p69
      %p71 = scmp.ne.s32.totalorder %s60, %s63
      %p72 = scmp.eq.s32.totalorder %s17, 1
      %p73 = por %p71, %p72
      %p74 = scmp.ne.s32.totalorder %s63, %s64
      %p75 = scmp.eq.s32.totalorder %s17, 0
      %p76 = por %p74, %p75
      %p77 = scmp.ne.s32.totalorder %s63, %s64
      %p78 = scmp.eq.s32.totalorder %s18, 1
      %p79 = por %p77, %p78
      %p81 = scmp.ne.s32.totalorder %s64, %s80
      %p82 = scmp.eq.s32.totalorder %s18, 0
      %p83 = por %p81, %p82
      %s84 = ssub.s32 %s20, %s27
      %p85 = scmp.eq.s32.totalorder %s84, 0
      %s87 = sadd.s32 %s86, 1
      %s88 = scalar_select %p85, %s86, %s87
      %p91 = pneg %p85
      %p92 = scmp.eq.s32.totalorder %s12, 1
      %p93 = por %p91, %p92
      %p94 = scmp.ne.s32.totalorder %s86, %s89
      %p95 = scmp.eq.s32.totalorder %s12, 0
      %p96 = por %p94, %p95
      %p97 = scmp.ne.s32.totalorder %s86, %s89
      %p98 = scmp.eq.s32.totalorder %s17, 1
      %p99 = por %p97, %p98
      %p100 = scmp.ne.s32.totalorder %s89, %s90
      %p101 = scmp.eq.s32.totalorder %s17, 0
      %p102 = por %p100, %p101
      %p103 = scmp.ne.s32.totalorder %s89, %s90
      %p104 = scmp.eq.s32.totalorder %s18, 1
      %p105 = por %p103, %p104
      %p107 = scmp.ne.s32.totalorder %s90, %s106
      %p108 = scmp.eq.s32.totalorder %s18, 0
      %p109 = por %p107, %p108
      %s110 = ssub.s32 %s19, %s31
      %s111 = ssub.s32 %s20, %s27
      %s112 = sor.u32 %s110, %s111
      %p113 = scmp.eq.s32.totalorder %s112, 0
      %s115 = sadd.s32 %s114, 1
      %s116 = scalar_select %p113, %s114, %s115
      %p119 = pneg %p113
      %p120 = scmp.eq.s32.totalorder %s12, 1
      %p121 = por %p119, %p120
      %p122 = scmp.ne.s32.totalorder %s114, %s117
      %p123 = scmp.eq.s32.totalorder %s12, 0
      %p124 = por %p122, %p123
      %p125 = scmp.ne.s32.totalorder %s114, %s117
      %p126 = scmp.eq.s32.totalorder %s17, 1
      %p127 = por %p125, %p126
      %p128 = scmp.ne.s32.totalorder %s117, %s118
      %p129 = scmp.eq.s32.totalorder %s17, 0
      %p130 = por %p128, %p129
      %p131 = scmp.ne.s32.totalorder %s117, %s118
      %p132 = scmp.eq.s32.totalorder %s18, 1
      %p133 = por %p131, %p132
      %p135 = scmp.ne.s32.totalorder %s118, %s134
      %p136 = scmp.eq.s32.totalorder %s18, 0
      %p137 = por %p135, %p136
      %p138 = scmp.le.s32.totalorder 1, %s12
      %p139 = scmp.lt.s32.totalorder %s12, 3
      %p140 = pnand %p138, %p139
      %p141 = pneg %p140
      // Predicated region
      $region9: #{down_forward.1} parent=5 // pred_check
        _
      $region10: #{down_forward.1} parent=5 // pred_check_branch
        %143 = sbr.rel (%p140) target = $region12
      $region11: #{down_forward.1} parent=5 // pred_region
        %s144 = ssub.s32 %s12, 1
        // Predicated region
        $region13: #{down_forward.1} parent=11 // pred_check
          %p145 = pneg %p76
        $region14: #{down_forward.1} parent=11 // pred_check_branch
          %147 = sbr.rel (%p145) target = $region16
        $region15: #{down_forward.1} parent=11 // pred_region
          %p148 = scmp.lt.s32.totalorder %s22, 0
          %s149 = scalar_select %p148, %s22, 0
          %s150 = smul.addr %s149, 2
          %s151 = scalar_lea.vmem %s1, %s150
        $region16: #{down_forward.1} parent=11 // pred_fallthru
          _
        // Predicated region
        $region17: #{down_forward.1} parent=11 // pred_check
          %p152 = pneg %p102
        $region18: #{down_forward.1} parent=11 // pred_check_branch
          %154 = sbr.rel (%p152) target = $region20
        $region19: #{down_forward.1} parent=11 // pred_region
          %p155 = scmp.lt.s32.totalorder %s22, 0
          %s156 = scalar_select %p155, %s22, 0
          %s157 = scalar_lea.vmem %s2, %s156
        $region20: #{down_forward.1} parent=11 // pred_fallthru
          _
      $region12: #{down_forward.1} parent=5 // pred_fallthru
        _
      %p158 = scmp.lt.s32.totalorder %s12, 2
      // Predicated region
      $region21: #{down_forward.1} parent=5 // pred_check
        %p159 = pneg %p158
      $region22: #{down_forward.1} parent=5 // pred_check_branch
        %161 = sbr.rel (%p159) target = $region24
      $region23: #{down_forward.1} parent=5 // pred_region
        // Predicated region
        $region25: #{down_forward.1} parent=23 // pred_check
          %p162 = pneg %p44
        $region26: #{down_forward.1} parent=23 // pred_check_branch
          %164 = sbr.rel (%p162) target = $region28
        $region27: #{down_forward.1} parent=23 // pred_region
          %s165 = smul.u32 4, %s19
          %p166 = scmp.lt.s32.totalorder %s165, 7
          %s167 = scalar_select %p166, %s165, 7
          %s168 = smul.addr %s167, 18
          %s169 = smul.addr %s168, 4
          %s170 = scalar_lea.vmem %s0, %s169
          %s171 = smul.u32 4, %s19
        $region28: #{down_forward.1} parent=23 // pred_fallthru
          _
      $region24: #{down_forward.1} parent=5 // pred_fallthru
        _
      %p172 = scmp.le.s32.totalorder 1, %s12
      %p173 = scmp.lt.s32.totalorder %s12, 3
      %p174 = pnand %p172, %p173
      %p175 = pneg %p174
      // Predicated region
      $region29: #{down_forward.1} parent=5 // pred_check
        _
      $region30: #{down_forward.1} parent=5 // pred_check_branch
        %177 = sbr.rel (%p174) target = $region32
      $region31: #{down_forward.1} parent=5 // pred_region
        %s178 = ssub.s32 %s12, 1
        %s179 = smul.u32 4, %s21
        %p180 = scmp.lt.s32.totalorder %s179, 7
        %s181 = scalar_select %p180, %s179, 7
        %s182 = smul.addr %s181, 18
        %s183 = smul.addr %s182, 4
        %s184 = scalar_lea.vmem %s0, %s183
        %p185 = pneg %p50
        %p186 = pneg %p47
        %p187 = scmp.lt.s32.totalorder %s22, 0
        %s188 = scalar_select %p187, %s22, 0
        %s189 = smul.addr %s188, 2
        %s190 = scalar_lea.vmem %s1, %s189
        %p191 = pneg %p76
        %p192 = pneg %p73
        %p193 = scmp.lt.s32.totalorder %s22, 0
        %s194 = scalar_select %p193, %s22, 0
        %s195 = scalar_lea.vmem %s2, %s194
        %p196 = pneg %p102
        %p197 = pneg %p99
        %p198 = pneg %p130
        %p199 = pneg %p127
        %s200 = sand.u32 %s117, 1
        %s201 = scalar_lea.sflag [#allocation4], %s200
        %s202 = sand.u32 %s117, 1
        %s203 = smul.addr %s202, 64
        %s204 = scalar_lea.vmem [#allocation3], %s203
        %s205 = smul.u32 4, %s21
        %p206 = scmp.lt.s32.totalorder %s205, 7
        %s207 = scalar_select %p206, %s205, 7
        %s208 = smul.addr %s207, 18
        %s209 = smul.addr %s208, 4
        %s210 = scalar_lea.vmem %s0, %s209
        %s211 = smul.u32 4, %s21
        %p212 = scmp.lt.s32.totalorder %s22, 0
        %s213 = scalar_select %p212, %s22, 0
        %s214 = smul.addr %s213, 2
        %s215 = scalar_lea.vmem %s1, %s214
        %p216 = scmp.lt.s32.totalorder %s22, 0
        %s217 = scalar_select %p216, %s22, 0
        %s218 = scalar_lea.vmem %s2, %s217
        %vm220 = vcmask 261120
        %221 = vst.msk [vmem:[#allocation2] sm:$0xff] %vm220, 0.0
        %222 = vst.msk [vmem:[#allocation2 + $0x8] sm:$0xff] %vm220, 0.0
        %223 = vst.msk [vmem:[#allocation2 + $0x10] sm:$0xff] %vm220, 0.0
        %224 = vst.msk [vmem:[#allocation2 + $0x18] sm:$0xff] %vm220, 0.0
        %225 = vst.msk [vmem:[#allocation2 + $0x20] sm:$0xff] %vm220, 0.0
        %226 = vst.msk [vmem:[#allocation2 + $0x28] sm:$0xff] %vm220, 0.0
        %227 = vst.msk [vmem:[#allocation2 + $0x30] sm:$0xff] %vm220, 0.0
        %228 = vst.msk [vmem:[#allocation2 + $0x38] sm:$0xff] %vm220, 0.0
        %v229 = vld [vmem:[%s210] sm:$0xf]
        %v230 = vld [vmem:[%s210 + $0x8] sm:$0xf]
        %v231 = vld [vmem:[%s210 + $0x10] sm:$0xf]
        %v232 = vld [vmem:[%s210 + $0x18] sm:$0xf]
        %v233 = vld [vmem:[%s210 + $0x20] sm:$0xf]
        %v234 = vld [vmem:[%s210 + $0x28] sm:$0xf]
        %v235 = vld [vmem:[%s210 + $0x30] sm:$0xf]
        %v236 = vld [vmem:[%s210 + $0x38] sm:$0xf]
        %v237 = vld [vmem:[#allocation2] sm:$0xff]
        %v238 = vld [vmem:[#allocation2 + $0x8] sm:$0xff]
        %v239 = vld [vmem:[#allocation2 + $0x10] sm:$0xff]
        %v240 = vld [vmem:[#allocation2 + $0x18] sm:$0xff]
        %v241 = vld [vmem:[#allocation2 + $0x20] sm:$0xff]
        %v242 = vld [vmem:[#allocation2 + $0x28] sm:$0xff]
        %v243 = vld [vmem:[#allocation2 + $0x30] sm:$0xff]
        %v244 = vld [vmem:[#allocation2 + $0x38] sm:$0xff]
        %v245 = vld [vmem:[%s215] sm:$0x3]
        %v254 = vunpack.c.l.b16 %v229
        %v255 = vunpack.c.l.b16 %v230
        %v256 = vunpack.c.l.b16 %v231
        %v257 = vunpack.c.l.b16 %v232
        %v258 = vunpack.c.l.b16 %v233
        %v259 = vunpack.c.l.b16 %v234
        %v260 = vunpack.c.l.b16 %v235
        %v261 = vunpack.c.l.b16 %v236
        %v262 = vpack.c.b16 %v255, %v254
        %v263 = vpack.c.b16 %v257, %v256
        %v264 = vpack.c.b16 %v259, %v258
        %v265 = vpack.c.b16 %v261, %v260
        %vm266 = vcmask 31744
        %v268 = vsel %vm266, %v262, 0
        %v271 = vsel %vm266, %v263, 0
        %v274 = vsel %vm266, %v264, 0
        %v277 = vsel %vm266, %v265, 0
        %vm279 = vcmask 1041408
        %v281 = vsel %vm279, %v245, 0
        %283 = vmatprep.subr.bf16.mxu0 0
        %284 = vmatpush1.bf16.msra.mxu0 %v281
        %285 = vmatprep.subr.bf16.mxu0 0
        %286 = vmatpush1.bf16.msra.mxu0 0
        %287 = vmatprep.subr.bf16.mxu0 0
        %288 = vmatpush1.bf16.msra.mxu0 0
        %289 = vmatprep.subr.bf16.mxu0 0
        %290 = vmatpush1.bf16.msra.mxu0 0
        %291 = vmatprep.subr.bf16.mxu0 0
        %292 = vmatpush1.bf16.msra.mxu0 0
        %293 = vmatprep.subr.bf16.mxu0 0
        %294 = vmatpush1.bf16.msra.mxu0 0
        %295 = vmatprep.subr.bf16.mxu0 0
        %296 = vmatpush1.bf16.msra.mxu0 0
        %297 = vmatprep.subr.bf16.mxu0 0
        %298 = vmatpush1.bf16.msra.mxu0 0
        %299 = vmatprep.subr.bf16.mxu0 0
        %300 = vmatpush1.bf16.msra.mxu0 0
        %301 = vmatprep.subr.bf16.mxu0 0
        %302 = vmatpush1.bf16.msra.mxu0 0
        %303 = vmatprep.subr.bf16.mxu0 0
        %304 = vmatpush1.bf16.msra.mxu0 0
        %305 = vmatprep.subr.bf16.mxu0 0
        %306 = vmatpush1.bf16.msra.mxu0 0
        %307 = vmatprep.subr.bf16.mxu0 0
        %308 = vmatpush1.bf16.msra.mxu0 0
        %309 = vmatprep.subr.bf16.mxu0 0
        %310 = vmatpush1.bf16.msra.mxu0 0
        %311 = vmatprep.subr.bf16.mxu0 0
        %312 = vmatpush1.bf16.msra.mxu0 0
        %313 = vmatprep.subr.bf16.mxu0 0
        %314 = vmatpush1.bf16.msra.mxu0 0
        %315 = vmatprep.mubr.bf16.mxu0 0
        %316 = vmatmul.mubr.bf16.gmra.mrb[0].mxu0 %v268
        %v317 = vpop.f32.mrb[0].mxu0
        %v318 = vadd.f32 0.0, %v317
        %v319 = vpop.f32.mrb[0].mxu0
        %v320 = vpop.f32.mrb[0].mxu0
        %v321 = vadd.f32 0.0, %v320
        %v322 = vpop.f32.mrb[0].mxu0
        %323 = vmatprep.mubr.bf16.mxu0 0
        %324 = vmatmul.mubr.bf16.gmra.mrb[0].mxu0 %v271
        %v325 = vpop.f32.mrb[0].mxu0
        %v326 = vadd.f32 0.0, %v325
        %v327 = vpop.f32.mrb[0].mxu0
        %v328 = vpop.f32.mrb[0].mxu0
        %v329 = vadd.f32 0.0, %v328
        %v330 = vpop.f32.mrb[0].mxu0
        %331 = vmatprep.mubr.bf16.mxu0 0
        %332 = vmatmul.mubr.bf16.gmra.mrb[0].mxu0 %v274
        %v333 = vpop.f32.mrb[0].mxu0
        %v334 = vadd.f32 0.0, %v333
        %v335 = vpop.f32.mrb[0].mxu0
        %v336 = vpop.f32.mrb[0].mxu0
        %v337 = vadd.f32 0.0, %v336
        %v338 = vpop.f32.mrb[0].mxu0
        %339 = vmatprep.mubr.bf16.mxu0 0
        %340 = vmatmul.mubr.bf16.gmra.mrb[0].mxu0 %v277
        %v341 = vpop.f32.mrb[0].mxu0
        %v342 = vadd.f32 0.0, %v341
        %v343 = vpop.f32.mrb[0].mxu0
        %v344 = vpop.f32.mrb[0].mxu0
        %v345 = vadd.f32 0.0, %v344
        %v346 = vpop.f32.mrb[0].mxu0
        %347 = vdwg.mxu0
        %v348 = vadd.f32 %v237, %v318
        %v349 = vadd.f32 %v238, %v321
        %v350 = vadd.f32 %v239, %v326
        %v351 = vadd.f32 %v240, %v329
        %v352 = vadd.f32 %v241, %v334
        %v353 = vadd.f32 %v242, %v337
        %v354 = vadd.f32 %v243, %v342
        %v355 = vadd.f32 %v244, %v345
        %356 = vst.msk [vmem:[#allocation2] sm:$0xff] %vm220, %v348
        %357 = vst.msk [vmem:[#allocation2 + $0x8] sm:$0xff] %vm220, %v349
        %358 = vst.msk [vmem:[#allocation2 + $0x10] sm:$0xff] %vm220, %v350
        %359 = vst.msk [vmem:[#allocation2 + $0x18] sm:$0xff] %vm220, %v351
        %360 = vst.msk [vmem:[#allocation2 + $0x20] sm:$0xff] %vm220, %v352
        %361 = vst.msk [vmem:[#allocation2 + $0x28] sm:$0xff] %vm220, %v353
        %362 = vst.msk [vmem:[#allocation2 + $0x30] sm:$0xff] %vm220, %v354
        %363 = vst.msk [vmem:[#allocation2 + $0x38] sm:$0xff] %vm220, %v355
        %s364 = scalar_lea.vmem %s210, 72
        %v365 = vld [vmem:[%s364] sm:$0xf]
        %v366 = vld [vmem:[%s364 + $0x8] sm:$0xf]
        %v367 = vld [vmem:[%s364 + $0x10] sm:$0xf]
        %v368 = vld [vmem:[%s364 + $0x18] sm:$0xf]
        %v369 = vld [vmem:[%s364 + $0x20] sm:$0xf]
        %v370 = vld [vmem:[%s364 + $0x28] sm:$0xf]
        %v371 = vld [vmem:[%s364 + $0x30] sm:$0xf]
        %v372 = vld [vmem:[%s364 + $0x38] sm:$0xf]
        %v373 = vld [vmem:[#allocation2] sm:$0xff]
        %v374 = vld [vmem:[#allocation2 + $0x8] sm:$0xff]
        %v375 = vld [vmem:[#allocation2 + $0x10] sm:$0xff]
        %v376 = vld [vmem:[#allocation2 + $0x18] sm:$0xff]
        %v377 = vld [vmem:[#allocation2 + $0x20] sm:$0xff]
        %v378 = vld [vmem:[#allocation2 + $0x28] sm:$0xff]
        %v379 = vld [vmem:[#allocation2 + $0x30] sm:$0xff]
        %v380 = vld [vmem:[#allocation2 + $0x38] sm:$0xff]
        %s381 = scalar_lea.vmem %s215, 2
        %v382 = vld [vmem:[%s381] sm:$0x3]
        %v391 = vunpack.c.l.b16 %v365
        %v392 = vunpack.c.l.b16 %v366
        %v393 = vunpack.c.l.b16 %v367
        %v394 = vunpack.c.l.b16 %v368
        %v395 = vunpack.c.l.b16 %v369
        %v396 = vunpack.c.l.b16 %v370
        %v397 = vunpack.c.l.b16 %v371
        %v398 = vunpack.c.l.b16 %v372
        %v399 = vpack.c.b16 %v392, %v391
        %v400 = vpack.c.b16 %v394, %v393
        %v401 = vpack.c.b16 %v396, %v395
        %v402 = vpack.c.b16 %v398, %v397
        %v404 = vsel %vm266, %v399, 0
        %v407 = vsel %vm266, %v400, 0
        %v410 = vsel %vm266, %v401, 0
        %v413 = vsel %vm266, %v402, 0
        %v416 = vsel %vm279, %v382, 0
        %418 = vmatprep.subr.bf16.mxu0 0
        %419 = vmatpush1.bf16.msra.mxu0 %v416
        %420 = vmatprep.subr.bf16.mxu0 0
        %421 = vmatpush1.bf16.msra.mxu0 0
        %422 = vmatprep.subr.bf16.mxu0 0
        %423 = vmatpush1.bf16.msra.mxu0 0
        %424 = vmatprep.subr.bf16.mxu0 0
        %425 = vmatpush1.bf16.msra.mxu0 0
        %426 = vmatprep.subr.bf16.mxu0 0
        %427 = vmatpush1.bf16.msra.mxu0 0
        %428 = vmatprep.subr.bf16.mxu0 0
        %429 = vmatpush1.bf16.msra.mxu0 0
        %430 = vmatprep.subr.bf16.mxu0 0
        %431 = vmatpush1.bf16.msra.mxu0 0
        %432 = vmatprep.subr.bf16.mxu0 0
        %433 = vmatpush1.bf16.msra.mxu0 0
        %434 = vmatprep.subr.bf16.mxu0 0
        %435 = vmatpush1.bf16.msra.mxu0 0
        %436 = vmatprep.subr.bf16.mxu0 0
        %437 = vmatpush1.bf16.msra.mxu0 0
        %438 = vmatprep.subr.bf16.mxu0 0
        %439 = vmatpush1.bf16.msra.mxu0 0
        %440 = vmatprep.subr.bf16.mxu0 0
        %441 = vmatpush1.bf16.msra.mxu0 0
        %442 = vmatprep.subr.bf16.mxu0 0
        %443 = vmatpush1.bf16.msra.mxu0 0
        %444 = vmatprep.subr.bf16.mxu0 0
        %445 = vmatpush1.bf16.msra.mxu0 0
        %446 = vmatprep.subr.bf16.mxu0 0
        %447 = vmatpush1.bf16.msra.mxu0 0
        %448 = vmatprep.subr.bf16.mxu0 0
        %449 = vmatpush1.bf16.msra.mxu0 0
        %450 = vmatprep.mubr.bf16.mxu0 0
        %451 = vmatmul.mubr.bf16.gmra.mrb[0].mxu0 %v404
        %v452 = vpop.f32.mrb[0].mxu0
        %v453 = vadd.f32 0.0, %v452
        %v454 = vpop.f32.mrb[0].mxu0
        %v455 = vpop.f32.mrb[0].mxu0
        %v456 = vadd.f32 0.0, %v455
        %v457 = vpop.f32.mrb[0].mxu0
        %458 = vmatprep.mubr.bf16.mxu0 0
        %459 = vmatmul.mubr.bf16.gmra.mrb[0].mxu0 %v407
        %v460 = vpop.f32.mrb[0].mxu0
        %v461 = vadd.f32 0.0, %v460
        %v462 = vpop.f32.mrb[0].mxu0
        %v463 = vpop.f32.mrb[0].mxu0
        %v464 = vadd.f32 0.0, %v463
        %v465 = vpop.f32.mrb[0].mxu0
        %466 = vmatprep.mubr.bf16.mxu0 0
        %467 = vmatmul.mubr.bf16.gmra.mrb[0].mxu0 %v410
        %v468 = vpop.f32.mrb[0].mxu0
        %v469 = vadd.f32 0.0, %v468
        %v470 = vpop.f32.mrb[0].mxu0
        %v471 = vpop.f32.mrb[0].mxu0
        %v472 = vadd.f32 0.0, %v471
        %v473 = vpop.f32.mrb[0].mxu0
        %474 = vmatprep.mubr.bf16.mxu0 0
        %475 = vmatmul.mubr.bf16.gmra.mrb[0].mxu0 %v413
        %v476 = vpop.f32.mrb[0].mxu0
        %v477 = vadd.f32 0.0, %v476
        %v478 = vpop.f32.mrb[0].mxu0
        %v479 = vpop.f32.mrb[0].mxu0
        %v480 = vadd.f32 0.0, %v479
        %v481 = vpop.f32.mrb[0].mxu0
        %482 = vdwg.mxu0
        %v483 = vadd.f32 %v373, %v453
        %v484 = vadd.f32 %v374, %v456
        %v485 = vadd.f32 %v375, %v461
        %v486 = vadd.f32 %v376, %v464
        %v487 = vadd.f32 %v377, %v469
        %v488 = vadd.f32 %v378, %v472
        %v489 = vadd.f32 %v379, %v477
        %v490 = vadd.f32 %v380, %v480
        %491 = vst.msk [vmem:[#allocation2] sm:$0xff] %vm220, %v483
        %492 = vst.msk [vmem:[#allocation2 + $0x8] sm:$0xff] %vm220, %v484
        %493 = vst.msk [vmem:[#allocation2 + $0x10] sm:$0xff] %vm220, %v485
        %494 = vst.msk [vmem:[#allocation2 + $0x18] sm:$0xff] %vm220, %v486
        %495 = vst.msk [vmem:[#allocation2 + $0x20] sm:$0xff] %vm220, %v487
        %496 = vst.msk [vmem:[#allocation2 + $0x28] sm:$0xff] %vm220, %v488
        %497 = vst.msk [vmem:[#allocation2 + $0x30] sm:$0xff] %vm220, %v489
        %498 = vst.msk [vmem:[#allocation2 + $0x38] sm:$0xff] %vm220, %v490
        %v499 = vld [vmem:[%s210] sm:$0xf]
        %v500 = vld [vmem:[%s210 + $0x4] sm:$0x1]
        %v501 = vld [vmem:[%s210 + $0x8] sm:$0xf]
        %v502 = vld [vmem:[%s210 + $0xc] sm:$0x1]
        %v503 = vld [vmem:[%s210 + $0x10] sm:$0xf]
        %v504 = vld [vmem:[%s210 + $0x14] sm:$0x1]
        %v505 = vld [vmem:[%s210 + $0x18] sm:$0xf]
        %v506 = vld [vmem:[%s210 + $0x1c] sm:$0x1]
        %v507 = vld [vmem:[%s210 + $0x20] sm:$0xf]
        %v508 = vld [vmem:[%s210 + $0x24] sm:$0x1]
        %v509 = vld [vmem:[%s210 + $0x28] sm:$0xf]
        %v510 = vld [vmem:[%s210 + $0x2c] sm:$0x1]
        %v511 = vld [vmem:[%s210 + $0x30] sm:$0xf]
        %v512 = vld [vmem:[%s210 + $0x34] sm:$0x1]
        %v513 = vld [vmem:[%s210 + $0x38] sm:$0xf]
        %v514 = vld [vmem:[%s210 + $0x3c] sm:$0x1]
        %vm515 = vsmask.f32 3328
        %vm516 = vsmask.f32 7440
        %vm517 = vmor %vm515, %vm516
        %v519 = vshrl.u32 %v499, 16
        %v521 = vrot.slane %v519, 4
        %v522 = vshll.u32 %v499, 16
        %v524 = vrot.slane %v522, 5
        %v525 = vor.u32 %v521, %v524
        %v526 = vrot.slane %v525, 4
        %v528 = vshll.u32 %v500, 16
        %v530 = vrot.slane %v528, 5
        %v531 = vsel %vm517, %v526, %v530
        %v533 = vshrl.u32 %v501, 16
        %v535 = vrot.slane %v533, 4
        %v536 = vshll.u32 %v501, 16
        %v538 = vrot.slane %v536, 5
        %v539 = vor.u32 %v535, %v538
        %v540 = vrot.slane %v539, 4
        %v542 = vshll.u32 %v502, 16
        %v544 = vrot.slane %v542, 5
        %v545 = vsel %vm517, %v540, %v544
        %v547 = vshrl.u32 %v503, 16
        %v549 = vrot.slane %v547, 4
        %v550 = vshll.u32 %v503, 16
        %v552 = vrot.slane %v550, 5
        %v553 = vor.u32 %v549, %v552
        %v554 = vrot.slane %v553, 4
        %v556 = vshll.u32 %v504, 16
        %v558 = vrot.slane %v556, 5
        %v559 = vsel %vm517, %v554, %v558
        %v561 = vshrl.u32 %v505, 16
        %v563 = vrot.slane %v561, 4
        %v564 = vshll.u32 %v505, 16
        %v566 = vrot.slane %v564, 5
        %v567 = vor.u32 %v563, %v566
        %v568 = vrot.slane %v567, 4
        %v570 = vshll.u32 %v506, 16
        %v572 = vrot.slane %v570, 5
        %v573 = vsel %vm517, %v568, %v572
        %v575 = vshrl.u32 %v507, 16
        %v577 = vrot.slane %v575, 4
        %v578 = vshll.u32 %v507, 16
        %v580 = vrot.slane %v578, 5
        %v581 = vor.u32 %v577, %v580
        %v582 = vrot.slane %v581, 4
        %v584 = vshll.u32 %v508, 16
        %v586 = vrot.slane %v584, 5
        %v587 = vsel %vm517, %v582, %v586
        %v589 = vshrl.u32 %v509, 16
        %v591 = vrot.slane %v589, 4
        %v592 = vshll.u32 %v509, 16
        %v594 = vrot.slane %v592, 5
        %v595 = vor.u32 %v591, %v594
        %v596 = vrot.slane %v595, 4
        %v598 = vshll.u32 %v510, 16
        %v600 = vrot.slane %v598, 5
        %v601 = vsel %vm517, %v596, %v600
        %v603 = vshrl.u32 %v511, 16
        %v605 = vrot.slane %v603, 4
        %v606 = vshll.u32 %v511, 16
        %v608 = vrot.slane %v606, 5
        %v609 = vor.u32 %v605, %v608
        %v610 = vrot.slane %v609, 4
        %v612 = vshll.u32 %v512, 16
        %v614 = vrot.slane %v612, 5
        %v615 = vsel %vm517, %v610, %v614
        %v617 = vshrl.u32 %v513, 16
        %v619 = vrot.slane %v617, 4
        %v620 = vshll.u32 %v513, 16
        %v622 = vrot.slane %v620, 5
        %v623 = vor.u32 %v619, %v622
        %v624 = vrot.slane %v623, 4
        %v626 = vshll.u32 %v514, 16
        %v628 = vrot.slane %v626, 5
        %v629 = vsel %vm517, %v624, %v628
        %v630 = vld [vmem:[#allocation2] sm:$0xff]
        %v631 = vld [vmem:[#allocation2 + $0x8] sm:$0xff]
        %v632 = vld [vmem:[#allocation2 + $0x10] sm:$0xff]
        %v633 = vld [vmem:[#allocation2 + $0x18] sm:$0xff]
        %v634 = vld [vmem:[#allocation2 + $0x20] sm:$0xff]
        %v635 = vld [vmem:[#allocation2 + $0x28] sm:$0xff]
        %v636 = vld [vmem:[#allocation2 + $0x30] sm:$0xff]
        %v637 = vld [vmem:[#allocation2 + $0x38] sm:$0xff]
        %s638 = scalar_lea.vmem %s215, 4
        %v639 = vld [vmem:[%s638] sm:$0x3]
        %v640 = vunpack.c.l.b16 %v531
        %v641 = vunpack.c.l.b16 %v545
        %v642 = vunpack.c.l.b16 %v559
        %v643 = vunpack.c.l.b16 %v573
        %v644 = vunpack.c.l.b16 %v587
        %v645 = vunpack.c.l.b16 %v601
        %v646 = vunpack.c.l.b16 %v615
        %v647 = vunpack.c.l.b16 %v629
        %v648 = vpack.c.b16 %v641, %v640
        %v649 = vpack.c.b16 %v643, %v642
        %v650 = vpack.c.b16 %v645, %v644
        %v651 = vpack.c.b16 %v647, %v646
        %v653 = vsel %vm266, %v648, 0
        %v656 = vsel %vm266, %v649, 0
        %v659 = vsel %vm266, %v650, 0
        %v662 = vsel %vm266, %v651, 0
        %v665 = vsel %vm279, %v639, 0
        %667 = vmatprep.subr.bf16.mxu0 0
        %668 = vmatpush1.bf16.msra.mxu0 %v665
        %669 = vmatprep.subr.bf16.mxu0 0
        %670 = vmatpush1.bf16.msra.mxu0 0
        %671 = vmatprep.subr.bf16.mxu0 0
        %672 = vmatpush1.bf16.msra.mxu0 0
        %673 = vmatprep.subr.bf16.mxu0 0
        %674 = vmatpush1.bf16.msra.mxu0 0
        %675 = vmatprep.subr.bf16.mxu0 0
        %676 = vmatpush1.bf16.msra.mxu0 0
        %677 = vmatprep.subr.bf16.mxu0 0
        %678 = vmatpush1.bf16.msra.mxu0 0
        %679 = vmatprep.subr.bf16.mxu0 0
        %680 = vmatpush1.bf16.msra.mxu0 0
        %681 = vmatprep.subr.bf16.mxu0 0
        %682 = vmatpush1.bf16.msra.mxu0 0
        %683 = vmatprep.subr.bf16.mxu0 0
        %684 = vmatpush1.bf16.msra.mxu0 0
        %685 = vmatprep.subr.bf16.mxu0 0
        %686 = vmatpush1.bf16.msra.mxu0 0
        %687 = vmatprep.subr.bf16.mxu0 0
        %688 = vmatpush1.bf16.msra.mxu0 0
        %689 = vmatprep.subr.bf16.mxu0 0
        %690 = vmatpush1.bf16.msra.mxu0 0
        %691 = vmatprep.subr.bf16.mxu0 0
        %692 = vmatpush1.bf16.msra.mxu0 0
        %693 = vmatprep.subr.bf16.mxu0 0
        %694 = vmatpush1.bf16.msra.mxu0 0
        %695 = vmatprep.subr.bf16.mxu0 0
        %696 = vmatpush1.bf16.msra.mxu0 0
        %697 = vmatprep.subr.bf16.mxu0 0
        %698 = vmatpush1.bf16.msra.mxu0 0
        %699 = vmatprep.mubr.bf16.mxu0 0
        %700 = vmatmul.mubr.bf16.gmra.mrb[0].mxu0 %v653
        %v701 = vpop.f32.mrb[0].mxu0
        %v702 = vadd.f32 0.0, %v701
        %v703 = vpop.f32.mrb[0].mxu0
        %v704 = vpop.f32.mrb[0].mxu0
        %v705 = vadd.f32 0.0, %v704
        %v706 = vpop.f32.mrb[0].mxu0
        %707 = vmatprep.mubr.bf16.mxu0 0
        %708 = vmatmul.mubr.bf16.gmra.mrb[0].mxu0 %v656
        %v709 = vpop.f32.mrb[0].mxu0
        %v710 = vadd.f32 0.0, %v709
        %v711 = vpop.f32.mrb[0].mxu0
        %v712 = vpop.f32.mrb[0].mxu0
        %v713 = vadd.f32 0.0, %v712
        %v714 = vpop.f32.mrb[0].mxu0
        %715 = vmatprep.mubr.bf16.mxu0 0
        %716 = vmatmul.mubr.bf16.gmra.mrb[0].mxu0 %v659
        %v717 = vpop.f32.mrb[0].mxu0
        %v718 = vadd.f32 0.0, %v717
        %v719 = vpop.f32.mrb[0].mxu0
        %v720 = vpop.f32.mrb[0].mxu0
        %v721 = vadd.f32 0.0, %v720
        %v722 = vpop.f32.mrb[0].mxu0
        %723 = vmatprep.mubr.bf16.mxu0 0
        %724 = vmatmul.mubr.bf16.gmra.mrb[0].mxu0 %v662
        %v725 = vpop.f32.mrb[0].mxu0
        %v726 = vadd.f32 0.0, %v725
        %v727 = vpop.f32.mrb[0].mxu0
        %v728 = vpop.f32.mrb[0].mxu0
        %v729 = vadd.f32 0.0, %v728
        %v730 = vpop.f32.mrb[0].mxu0
        %731 = vdwg.mxu0
        %v732 = vadd.f32 %v630, %v702
        %v733 = vadd.f32 %v631, %v705
        %v734 = vadd.f32 %v632, %v710
        %v735 = vadd.f32 %v633, %v713
        %v736 = vadd.f32 %v634, %v718
        %v737 = vadd.f32 %v635, %v721
        %v738 = vadd.f32 %v636, %v726
        %v739 = vadd.f32 %v637, %v729
        %740 = vst.msk [vmem:[#allocation2] sm:$0xff] %vm220, %v732
        %741 = vst.msk [vmem:[#allocation2 + $0x8] sm:$0xff] %vm220, %v733
        %742 = vst.msk [vmem:[#allocation2 + $0x10] sm:$0xff] %vm220, %v734
        %743 = vst.msk [vmem:[#allocation2 + $0x18] sm:$0xff] %vm220, %v735
        %744 = vst.msk [vmem:[#allocation2 + $0x20] sm:$0xff] %vm220, %v736
        %745 = vst.msk [vmem:[#allocation2 + $0x28] sm:$0xff] %vm220, %v737
        %746 = vst.msk [vmem:[#allocation2 + $0x30] sm:$0xff] %vm220, %v738
        %747 = vst.msk [vmem:[#allocation2 + $0x38] sm:$0xff] %vm220, %v739
        %s748 = scalar_lea.vmem %s210, 144
        %v749 = vld [vmem:[%s748] sm:$0xf]
        %v750 = vld [vmem:[%s748 + $0x8] sm:$0xf]
        %v751 = vld [vmem:[%s748 + $0x10] sm:$0xf]
        %v752 = vld [vmem:[%s748 + $0x18] sm:$0xf]
        %v753 = vld [vmem:[%s748 + $0x20] sm:$0xf]
        %v754 = vld [vmem:[%s748 + $0x28] sm:$0xf]
        %v755 = vld [vmem:[%s748 + $0x30] sm:$0xf]
        %v756 = vld [vmem:[%s748 + $0x38] sm:$0xf]
        %v757 = vld [vmem:[#allocation2] sm:$0xff]
        %v758 = vld [vmem:[#allocation2 + $0x8] sm:$0xff]
        %v759 = vld [vmem:[#allocation2 + $0x10] sm:$0xff]
        %v760 = vld [vmem:[#allocation2 + $0x18] sm:$0xff]
        %v761 = vld [vmem:[#allocation2 + $0x20] sm:$0xff]
        %v762 = vld [vmem:[#allocation2 + $0x28] sm:$0xff]
        %v763 = vld [vmem:[#allocation2 + $0x30] sm:$0xff]
        %v764 = vld [vmem:[#allocation2 + $0x38] sm:$0xff]
        %s765 = scalar_lea.vmem %s215, 6
        %v766 = vld [vmem:[%s765] sm:$0x3]
        %v775 = vunpack.c.l.b16 %v749
        %v776 = vunpack.c.l.b16 %v750
        %v777 = vunpack.c.l.b16 %v751
        %v778 = vunpack.c.l.b16 %v752
        %v779 = vunpack.c.l.b16 %v753
        %v780 = vunpack.c.l.b16 %v754
        %v781 = vunpack.c.l.b16 %v755
        %v782 = vunpack.c.l.b16 %v756
        %v783 = vpack.c.b16 %v776, %v775
        %v784 = vpack.c.b16 %v778, %v777
        %v785 = vpack.c.b16 %v780, %v779
        %v786 = vpack.c.b16 %v782, %v781
        %v788 = vsel %vm266, %v783, 0
        %v791 = vsel %vm266, %v784, 0
        %v794 = vsel %vm266, %v785, 0
        %v797 = vsel %vm266, %v786, 0
        %v800 = vsel %vm279, %v766, 0
        %802 = vmatprep.subr.bf16.mxu0 0
        %803 = vmatpush1.bf16.msra.mxu0 %v800
        %804 = vmatprep.subr.bf16.mxu0 0
        %805 = vmatpush1.bf16.msra.mxu0 0
        %806 = vmatprep.subr.bf16.mxu0 0
        %807 = vmatpush1.bf16.msra.mxu0 0
        %808 = vmatprep.subr.bf16.mxu0 0
        %809 = vmatpush1.bf16.msra.mxu0 0
        %810 = vmatprep.subr.bf16.mxu0 0
        %811 = vmatpush1.bf16.msra.mxu0 0
        %812 = vmatprep.subr.bf16.mxu0 0
        %813 = vmatpush1.bf16.msra.mxu0 0
        %814 = vmatprep.subr.bf16.mxu0 0
        %815 = vmatpush1.bf16.msra.mxu0 0
        %816 = vmatprep.subr.bf16.mxu0 0
        %817 = vmatpush1.bf16.msra.mxu0 0
        %818 = vmatprep.subr.bf16.mxu0 0
        %819 = vmatpush1.bf16.msra.mxu0 0
        %820 = vmatprep.subr.bf16.mxu0 0
        %821 = vmatpush1.bf16.msra.mxu0 0
        %822 = vmatprep.subr.bf16.mxu0 0
        %823 = vmatpush1.bf16.msra.mxu0 0
        %824 = vmatprep.subr.bf16.mxu0 0
        %825 = vmatpush1.bf16.msra.mxu0 0
        %826 = vmatprep.subr.bf16.mxu0 0
        %827 = vmatpush1.bf16.msra.mxu0 0
        %828 = vmatprep.subr.bf16.mxu0 0
        %829 = vmatpush1.bf16.msra.mxu0 0
        %830 = vmatprep.subr.bf16.mxu0 0
        %831 = vmatpush1.bf16.msra.mxu0 0
        %832 = vmatprep.subr.bf16.mxu0 0
        %833 = vmatpush1.bf16.msra.mxu0 0
        %834 = vmatprep.mubr.bf16.mxu0 0
        %835 = vmatmul.mubr.bf16.gmra.mrb[0].mxu0 %v788
        %v836 = vpop.f32.mrb[0].mxu0
        %v837 = vadd.f32 0.0, %v836
        %v838 = vpop.f32.mrb[0].mxu0
        %v839 = vpop.f32.mrb[0].mxu0
        %v840 = vadd.f32 0.0, %v839
        %v841 = vpop.f32.mrb[0].mxu0
        %842 = vmatprep.mubr.bf16.mxu0 0
        %843 = vmatmul.mubr.bf16.gmra.mrb[0].mxu0 %v791
        %v844 = vpop.f32.mrb[0].mxu0
        %v845 = vadd.f32 0.0, %v844
        %v846 = vpop.f32.mrb[0].mxu0
        %v847 = vpop.f32.mrb[0].mxu0
        %v848 = vadd.f32 0.0, %v847
        %v849 = vpop.f32.mrb[0].mxu0
        %850 = vmatprep.mubr.bf16.mxu0 0
        %851 = vmatmul.mubr.bf16.gmra.mrb[0].mxu0 %v794
        %v852 = vpop.f32.mrb[0].mxu0
        %v853 = vadd.f32 0.0, %v852
        %v854 = vpop.f32.mrb[0].mxu0
        %v855 = vpop.f32.mrb[0].mxu0
        %v856 = vadd.f32 0.0, %v855
        %v857 = vpop.f32.mrb[0].mxu0
        %858 = vmatprep.mubr.bf16.mxu0 0
        %859 = vmatmul.mubr.bf16.gmra.mrb[0].mxu0 %v797
        %v860 = vpop.f32.mrb[0].mxu0
        %v861 = vadd.f32 0.0, %v860
        %v862 = vpop.f32.mrb[0].mxu0
        %v863 = vpop.f32.mrb[0].mxu0
        %v864 = vadd.f32 0.0, %v863
        %v865 = vpop.f32.mrb[0].mxu0
        %866 = vdwg.mxu0
        %v867 = vadd.f32 %v757, %v837
        %v868 = vadd.f32 %v758, %v840
        %v869 = vadd.f32 %v759, %v845
        %v870 = vadd.f32 %v760, %v848
        %v871 = vadd.f32 %v761, %v853
        %v872 = vadd.f32 %v762, %v856
        %v873 = vadd.f32 %v763, %v861
        %v874 = vadd.f32 %v764, %v864
        %875 = vst.msk [vmem:[#allocation2] sm:$0xff] %vm220, %v867
        %876 = vst.msk [vmem:[#allocation2 + $0x8] sm:$0xff] %vm220, %v868
        %877 = vst.msk [vmem:[#allocation2 + $0x10] sm:$0xff] %vm220, %v869
        %878 = vst.msk [vmem:[#allocation2 + $0x18] sm:$0xff] %vm220, %v870
        %879 = vst.msk [vmem:[#allocation2 + $0x20] sm:$0xff] %vm220, %v871
        %880 = vst.msk [vmem:[#allocation2 + $0x28] sm:$0xff] %vm220, %v872
        %881 = vst.msk [vmem:[#allocation2 + $0x30] sm:$0xff] %vm220, %v873
        %882 = vst.msk [vmem:[#allocation2 + $0x38] sm:$0xff] %vm220, %v874
        %s883 = scalar_lea.vmem %s210, 216
        %v884 = vld [vmem:[%s883] sm:$0xf]
        %v885 = vld [vmem:[%s883 + $0x8] sm:$0xf]
        %v886 = vld [vmem:[%s883 + $0x10] sm:$0xf]
        %v887 = vld [vmem:[%s883 + $0x18] sm:$0xf]
        %v888 = vld [vmem:[%s883 + $0x20] sm:$0xf]
        %v889 = vld [vmem:[%s883 + $0x28] sm:$0xf]
        %v890 = vld [vmem:[%s883 + $0x30] sm:$0xf]
        %v891 = vld [vmem:[%s883 + $0x38] sm:$0xf]
        %v892 = vld [vmem:[#allocation2] sm:$0xff]
        %v893 = vld [vmem:[#allocation2 + $0x8] sm:$0xff]
        %v894 = vld [vmem:[#allocation2 + $0x10] sm:$0xff]
        %v895 = vld [vmem:[#allocation2 + $0x18] sm:$0xff]
        %v896 = vld [vmem:[#allocation2 + $0x20] sm:$0xff]
        %v897 = vld [vmem:[#allocation2 + $0x28] sm:$0xff]
        %v898 = vld [vmem:[#allocation2 + $0x30] sm:$0xff]
        %v899 = vld [vmem:[#allocation2 + $0x38] sm:$0xff]
        %s900 = scalar_lea.vmem %s215, 8
        %v901 = vld [vmem:[%s900] sm:$0x3]
        %v910 = vunpack.c.l.b16 %v884
        %v911 = vunpack.c.l.b16 %v885
        %v912 = vunpack.c.l.b16 %v886
        %v913 = vunpack.c.l.b16 %v887
        %v914 = vunpack.c.l.b16 %v888
        %v915 = vunpack.c.l.b16 %v889
        %v916 = vunpack.c.l.b16 %v890
        %v917 = vunpack.c.l.b16 %v891
        %v918 = vpack.c.b16 %v911, %v910
        %v919 = vpack.c.b16 %v913, %v912
        %v920 = vpack.c.b16 %v915, %v914
        %v921 = vpack.c.b16 %v917, %v916
        %v923 = vsel %vm266, %v918, 0
        %v926 = vsel %vm266, %v919, 0
        %v929 = vsel %vm266, %v920, 0
        %v932 = vsel %vm266, %v921, 0
        %v935 = vsel %vm279, %v901, 0
        %937 = vmatprep.subr.bf16.mxu0 0
        %938 = vmatpush1.bf16.msra.mxu0 %v935
        %939 = vmatprep.subr.bf16.mxu0 0
        %940 = vmatpush1.bf16.msra.mxu0 0
        %941 = vmatprep.subr.bf16.mxu0 0
        %942 = vmatpush1.bf16.msra.mxu0 0
        %943 = vmatprep.subr.bf16.mxu0 0
        %944 = vmatpush1.bf16.msra.mxu0 0
        %945 = vmatprep.subr.bf16.mxu0 0
        %946 = vmatpush1.bf16.msra.mxu0 0
        %947 = vmatprep.subr.bf16.mxu0 0
        %948 = vmatpush1.bf16.msra.mxu0 0
        %949 = vmatprep.subr.bf16.mxu0 0
        %950 = vmatpush1.bf16.msra.mxu0 0
        %951 = vmatprep.subr.bf16.mxu0 0
        %952 = vmatpush1.bf16.msra.mxu0 0
        %953 = vmatprep.subr.bf16.mxu0 0
        %954 = vmatpush1.bf16.msra.mxu0 0
        %955 = vmatprep.subr.bf16.mxu0 0
        %956 = vmatpush1.bf16.msra.mxu0 0
        %957 = vmatprep.subr.bf16.mxu0 0
        %958 = vmatpush1.bf16.msra.mxu0 0
        %959 = vmatprep.subr.bf16.mxu0 0
        %960 = vmatpush1.bf16.msra.mxu0 0
        %961 = vmatprep.subr.bf16.mxu0 0
        %962 = vmatpush1.bf16.msra.mxu0 0
        %963 = vmatprep.subr.bf16.mxu0 0
        %964 = vmatpush1.bf16.msra.mxu0 0
        %965 = vmatprep.subr.bf16.mxu0 0
        %966 = vmatpush1.bf16.msra.mxu0 0
        %967 = vmatprep.subr.bf16.mxu0 0
        %968 = vmatpush1.bf16.msra.mxu0 0
        %969 = vmatprep.mubr.bf16.mxu0 0
        %970 = vmatmul.mubr.bf16.gmra.mrb[0].mxu0 %v923
        %v971 = vpop.f32.mrb[0].mxu0
        %v972 = vadd.f32 0.0, %v971
        %v973 = vpop.f32.mrb[0].mxu0
        %v974 = vpop.f32.mrb[0].mxu0
        %v975 = vadd.f32 0.0, %v974
        %v976 = vpop.f32.mrb[0].mxu0
        %977 = vmatprep.mubr.bf16.mxu0 0
        %978 = vmatmul.mubr.bf16.gmra.mrb[0].mxu0 %v926
        %v979 = vpop.f32.mrb[0].mxu0
        %v980 = vadd.f32 0.0, %v979
        %v981 = vpop.f32.mrb[0].mxu0
        %v982 = vpop.f32.mrb[0].mxu0
        %v983 = vadd.f32 0.0, %v982
        %v984 = vpop.f32.mrb[0].mxu0
        %985 = vmatprep.mubr.bf16.mxu0 0
        %986 = vmatmul.mubr.bf16.gmra.mrb[0].mxu0 %v929
        %v987 = vpop.f32.mrb[0].mxu0
        %v988 = vadd.f32 0.0, %v987
        %v989 = vpop.f32.mrb[0].mxu0
        %v990 = vpop.f32.mrb[0].mxu0
        %v991 = vadd.f32 0.0, %v990
        %v992 = vpop.f32.mrb[0].mxu0
        %993 = vmatprep.mubr.bf16.mxu0 0
        %994 = vmatmul.mubr.bf16.gmra.mrb[0].mxu0 %v932
        %v995 = vpop.f32.mrb[0].mxu0
        %v996 = vadd.f32 0.0, %v995
        %v997 = vpop.f32.mrb[0].mxu0
        %v998 = vpop.f32.mrb[0].mxu0
        %v999 = vadd.f32 0.0, %v998
        %v1000 = vpop.f32.mrb[0].mxu0
        %1001 = vdwg.mxu0
        %v1002 = vadd.f32 %v892, %v972
        %v1003 = vadd.f32 %v893, %v975
        %v1004 = vadd.f32 %v894, %v980
        %v1005 = vadd.f32 %v895, %v983
        %v1006 = vadd.f32 %v896, %v988
        %v1007 = vadd.f32 %v897, %v991
        %v1008 = vadd.f32 %v898, %v996
        %v1009 = vadd.f32 %v899, %v999
        %1010 = vst.msk [vmem:[#allocation2] sm:$0xff] %vm220, %v1002
        %1011 = vst.msk [vmem:[#allocation2 + $0x8] sm:$0xff] %vm220, %v1003
        %1012 = vst.msk [vmem:[#allocation2 + $0x10] sm:$0xff] %vm220, %v1004
        %1013 = vst.msk [vmem:[#allocation2 + $0x18] sm:$0xff] %vm220, %v1005
        %1014 = vst.msk [vmem:[#allocation2 + $0x20] sm:$0xff] %vm220, %v1006
        %1015 = vst.msk [vmem:[#allocation2 + $0x28] sm:$0xff] %vm220, %v1007
        %1016 = vst.msk [vmem:[#allocation2 + $0x30] sm:$0xff] %vm220, %v1008
        %1017 = vst.msk [vmem:[#allocation2 + $0x38] sm:$0xff] %vm220, %v1009
        %v1018 = vld [vmem:[%s748] sm:$0xf]
        %v1019 = vld [vmem:[%s748 + $0x4] sm:$0x1]
        %v1020 = vld [vmem:[%s748 + $0x8] sm:$0xf]
        %v1021 = vld [vmem:[%s748 + $0xc] sm:$0x1]
        %v1022 = vld [vmem:[%s748 + $0x10] sm:$0xf]
        %v1023 = vld [vmem:[%s748 + $0x14] sm:$0x1]
        %v1024 = vld [vmem:[%s748 + $0x18] sm:$0xf]
        %v1025 = vld [vmem:[%s748 + $0x1c] sm:$0x1]
        %v1026 = vld [vmem:[%s748 + $0x20] sm:$0xf]
        %v1027 = vld [vmem:[%s748 + $0x24] sm:$0x1]
        %v1028 = vld [vmem:[%s748 + $0x28] sm:$0xf]
        %v1029 = vld [vmem:[%s748 + $0x2c] sm:$0x1]
        %v1030 = vld [vmem:[%s748 + $0x30] sm:$0xf]
        %v1031 = vld [vmem:[%s748 + $0x34] sm:$0x1]
        %v1032 = vld [vmem:[%s748 + $0x38] sm:$0xf]
        %v1033 = vld [vmem:[%s748 + $0x3c] sm:$0x1]
        %v1035 = vshrl.u32 %v1018, 16
        %v1037 = vrot.slane %v1035, 4
        %v1038 = vshll.u32 %v1018, 16
        %v1040 = vrot.slane %v1038, 5
        %v1041 = vor.u32 %v1037, %v1040
        %v1042 = vrot.slane %v1041, 4
        %v1044 = vshll.u32 %v1019, 16
        %v1046 = vrot.slane %v1044, 5
        %v1047 = vsel %vm517, %v1042, %v1046
        %v1049 = vshrl.u32 %v1020, 16
        %v1051 = vrot.slane %v1049, 4
        %v1052 = vshll.u32 %v1020, 16
        %v1054 = vrot.slane %v1052, 5
        %v1055 = vor.u32 %v1051, %v1054
        %v1056 = vrot.slane %v1055, 4
        %v1058 = vshll.u32 %v1021, 16
        %v1060 = vrot.slane %v1058, 5
        %v1061 = vsel %vm517, %v1056, %v1060
        %v1063 = vshrl.u32 %v1022, 16
        %v1065 = vrot.slane %v1063, 4
        %v1066 = vshll.u32 %v1022, 16
        %v1068 = vrot.slane %v1066, 5
        %v1069 = vor.u32 %v1065, %v1068
        %v1070 = vrot.slane %v1069, 4
        %v1072 = vshll.u32 %v1023, 16
        %v1074 = vrot.slane %v1072, 5
        %v1075 = vsel %vm517, %v1070, %v1074
        %v1077 = vshrl.u32 %v1024, 16
        %v1079 = vrot.slane %v1077, 4
        %v1080 = vshll.u32 %v1024, 16
        %v1082 = vrot.slane %v1080, 5
        %v1083 = vor.u32 %v1079, %v1082
        %v1084 = vrot.slane %v1083, 4
        %v1086 = vshll.u32 %v1025, 16
        %v1088 = vrot.slane %v1086, 5
        %v1089 = vsel %vm517, %v1084, %v1088
        %v1091 = vshrl.u32 %v1026, 16
        %v1093 = vrot.slane %v1091, 4
        %v1094 = vshll.u32 %v1026, 16
        %v1096 = vrot.slane %v1094, 5
        %v1097 = vor.u32 %v1093, %v1096
        %v1098 = vrot.slane %v1097, 4
        %v1100 = vshll.u32 %v1027, 16
        %v1102 = vrot.slane %v1100, 5
        %v1103 = vsel %vm517, %v1098, %v1102
        %v1105 = vshrl.u32 %v1028, 16
        %v1107 = vrot.slane %v1105, 4
        %v1108 = vshll.u32 %v1028, 16
        %v1110 = vrot.slane %v1108, 5
        %v1111 = vor.u32 %v1107, %v1110
        %v1112 = vrot.slane %v1111, 4
        %v1114 = vshll.u32 %v1029, 16
        %v1116 = vrot.slane %v1114, 5
        %v1117 = vsel %vm517, %v1112, %v1116
        %v1119 = vshrl.u32 %v1030, 16
        %v1121 = vrot.slane %v1119, 4
        %v1122 = vshll.u32 %v1030, 16
        %v1124 = vrot.slane %v1122, 5
        %v1125 = vor.u32 %v1121, %v1124
        %v1126 = vrot.slane %v1125, 4
        %v1128 = vshll.u32 %v1031, 16
        %v1130 = vrot.slane %v1128, 5
        %v1131 = vsel %vm517, %v1126, %v1130
        %v1133 = vshrl.u32 %v1032, 16
        %v1135 = vrot.slane %v1133, 4
        %v1136 = vshll.u32 %v1032, 16
        %v1138 = vrot.slane %v1136, 5
        %v1139 = vor.u32 %v1135, %v1138
        %v1140 = vrot.slane %v1139, 4
        %v1142 = vshll.u32 %v1033, 16
        %v1144 = vrot.slane %v1142, 5
        %v1145 = vsel %vm517, %v1140, %v1144
        %v1146 = vld [vmem:[#allocation2] sm:$0xff]
        %v1147 = vld [vmem:[#allocation2 + $0x8] sm:$0xff]
        %v1148 = vld [vmem:[#allocation2 + $0x10] sm:$0xff]
        %v1149 = vld [vmem:[#allocation2 + $0x18] sm:$0xff]
        %v1150 = vld [vmem:[#allocation2 + $0x20] sm:$0xff]
        %v1151 = vld [vmem:[#allocation2 + $0x28] sm:$0xff]
        %v1152 = vld [vmem:[#allocation2 + $0x30] sm:$0xff]
        %v1153 = vld [vmem:[#allocation2 + $0x38] sm:$0xff]
        %s1154 = scalar_lea.vmem %s215, 10
        %v1155 = vld [vmem:[%s1154] sm:$0x3]
        %v1156 = vunpack.c.l.b16 %v1047
        %v1157 = vunpack.c.l.b16 %v1061
        %v1158 = vunpack.c.l.b16 %v1075
        %v1159 = vunpack.c.l.b16 %v1089
        %v1160 = vunpack.c.l.b16 %v1103
        %v1161 = vunpack.c.l.b16 %v1117
        %v1162 = vunpack.c.l.b16 %v1131
        %v1163 = vunpack.c.l.b16 %v1145
        %v1164 = vpack.c.b16 %v1157, %v1156
        %v1165 = vpack.c.b16 %v1159, %v1158
        %v1166 = vpack.c.b16 %v1161, %v1160
        %v1167 = vpack.c.b16 %v1163, %v1162
        %v1169 = vsel %vm266, %v1164, 0
        %v1172 = vsel %vm266, %v1165, 0
        %v1175 = vsel %vm266, %v1166, 0
        %v1178 = vsel %vm266, %v1167, 0
        %v1181 = vsel %vm279, %v1155, 0
        %1183 = vmatprep.subr.bf16.mxu0 0
        %1184 = vmatpush1.bf16.msra.mxu0 %v1181
        %1185 = vmatprep.subr.bf16.mxu0 0
        %1186 = vmatpush1.bf16.msra.mxu0 0
        %1187 = vmatprep.subr.bf16.mxu0 0
        %1188 = vmatpush1.bf16.msra.mxu0 0
        %1189 = vmatprep.subr.bf16.mxu0 0
        %1190 = vmatpush1.bf16.msra.mxu0 0
        %1191 = vmatprep.subr.bf16.mxu0 0
        %1192 = vmatpush1.bf16.msra.mxu0 0
        %1193 = vmatprep.subr.bf16.mxu0 0
        %1194 = vmatpush1.bf16.msra.mxu0 0
        %1195 = vmatprep.subr.bf16.mxu0 0
        %1196 = vmatpush1.bf16.msra.mxu0 0
        %1197 = vmatprep.subr.bf16.mxu0 0
        %1198 = vmatpush1.bf16.msra.mxu0 0
        %1199 = vmatprep.subr.bf16.mxu0 0
        %1200 = vmatpush1.bf16.msra.mxu0 0
        %1201 = vmatprep.subr.bf16.mxu0 0
        %1202 = vmatpush1.bf16.msra.mxu0 0
        %1203 = vmatprep.subr.bf16.mxu0 0
        %1204 = vmatpush1.bf16.msra.mxu0 0
        %1205 = vmatprep.subr.bf16.mxu0 0
        %1206 = vmatpush1.bf16.msra.mxu0 0
        %1207 = vmatprep.subr.bf16.mxu0 0
        %1208 = vmatpush1.bf16.msra.mxu0 0
        %1209 = vmatprep.subr.bf16.mxu0 0
        %1210 = vmatpush1.bf16.msra.mxu0 0
        %1211 = vmatprep.subr.bf16.mxu0 0
        %1212 = vmatpush1.bf16.msra.mxu0 0
        %1213 = vmatprep.subr.bf16.mxu0 0
        %1214 = vmatpush1.bf16.msra.mxu0 0
        %1215 = vmatprep.mubr.bf16.mxu0 0
        %1216 = vmatmul.mubr.bf16.gmra.mrb[0].mxu0 %v1169
        %v1217 = vpop.f32.mrb[0].mxu0
        %v1218 = vadd.f32 0.0, %v1217
        %v1219 = vpop.f32.mrb[0].mxu0
        %v1220 = vpop.f32.mrb[0].mxu0
        %v1221 = vadd.f32 0.0, %v1220
        %v1222 = vpop.f32.mrb[0].mxu0
        %1223 = vmatprep.mubr.bf16.mxu0 0
        %1224 = vmatmul.mubr.bf16.gmra.mrb[0].mxu0 %v1172
        %v1225 = vpop.f32.mrb[0].mxu0
        %v1226 = vadd.f32 0.0, %v1225
        %v1227 = vpop.f32.mrb[0].mxu0
        %v1228 = vpop.f32.mrb[0].mxu0
        %v1229 = vadd.f32 0.0, %v1228
        %v1230 = vpop.f32.mrb[0].mxu0
        %1231 = vmatprep.mubr.bf16.mxu0 0
        %1232 = vmatmul.mubr.bf16.gmra.mrb[0].mxu0 %v1175
        %v1233 = vpop.f32.mrb[0].mxu0
        %v1234 = vadd.f32 0.0, %v1233
        %v1235 = vpop.f32.mrb[0].mxu0
        %v1236 = vpop.f32.mrb[0].mxu0
        %v1237 = vadd.f32 0.0, %v1236
        %v1238 = vpop.f32.mrb[0].mxu0
        %1239 = vmatprep.mubr.bf16.mxu0 0
        %1240 = vmatmul.mubr.bf16.gmra.mrb[0].mxu0 %v1178
        %v1241 = vpop.f32.mrb[0].mxu0
        %v1242 = vadd.f32 0.0, %v1241
        %v1243 = vpop.f32.mrb[0].mxu0
        %v1244 = vpop.f32.mrb[0].mxu0
        %v1245 = vadd.f32 0.0, %v1244
        %v1246 = vpop.f32.mrb[0].mxu0
        %1247 = vdwg.mxu0
        %v1248 = vadd.f32 %v1146, %v1218
        %v1249 = vadd.f32 %v1147, %v1221
        %v1250 = vadd.f32 %v1148, %v1226
        %v1251 = vadd.f32 %v1149, %v1229
        %v1252 = vadd.f32 %v1150, %v1234
        %v1253 = vadd.f32 %v1151, %v1237
        %v1254 = vadd.f32 %v1152, %v1242
        %v1255 = vadd.f32 %v1153, %v1245
        %1256 = vst.msk [vmem:[#allocation2] sm:$0xff] %vm220, %v1248
        %1257 = vst.msk [vmem:[#allocation2 + $0x8] sm:$0xff] %vm220, %v1249
        %1258 = vst.msk [vmem:[#allocation2 + $0x10] sm:$0xff] %vm220, %v1250
        %1259 = vst.msk [vmem:[#allocation2 + $0x18] sm:$0xff] %vm220, %v1251
        %1260 = vst.msk [vmem:[#allocation2 + $0x20] sm:$0xff] %vm220, %v1252
        %1261 = vst.msk [vmem:[#allocation2 + $0x28] sm:$0xff] %vm220, %v1253
        %1262 = vst.msk [vmem:[#allocation2 + $0x30] sm:$0xff] %vm220, %v1254
        %1263 = vst.msk [vmem:[#allocation2 + $0x38] sm:$0xff] %vm220, %v1255
        %s1264 = scalar_lea.vmem %s210, 8
        %v1265 = vld [vmem:[%s1264] sm:$0xf]
        %v1266 = vld [vmem:[%s1264 + $0x8] sm:$0xf]
        %v1267 = vld [vmem:[%s1264 + $0x10] sm:$0xf]
        %v1268 = vld [vmem:[%s1264 + $0x18] sm:$0xf]
        %v1269 = vld [vmem:[%s1264 + $0x20] sm:$0xf]
        %v1270 = vld [vmem:[%s1264 + $0x28] sm:$0xf]
        %v1271 = vld [vmem:[%s1264 + $0x30] sm:$0xf]
        %v1272 = vld [vmem:[%s1264 + $0x38] sm:$0xf]
        %v1273 = vld [vmem:[#allocation2] sm:$0xff]
        %v1274 = vld [vmem:[#allocation2 + $0x8] sm:$0xff]
        %v1275 = vld [vmem:[#allocation2 + $0x10] sm:$0xff]
        %v1276 = vld [vmem:[#allocation2 + $0x18] sm:$0xff]
        %v1277 = vld [vmem:[#allocation2 + $0x20] sm:$0xff]
        %v1278 = vld [vmem:[#allocation2 + $0x28] sm:$0xff]
        %v1279 = vld [vmem:[#allocation2 + $0x30] sm:$0xff]
        %v1280 = vld [vmem:[#allocation2 + $0x38] sm:$0xff]
        %s1281 = scalar_lea.vmem %s215, 12
        %v1282 = vld [vmem:[%s1281] sm:$0x3]
        %v1291 = vunpack.c.l.b16 %v1265
        %v1292 = vunpack.c.l.b16 %v1266
        %v1293 = vunpack.c.l.b16 %v1267
        %v1294 = vunpack.c.l.b16 %v1268
        %v1295 = vunpack.c.l.b16 %v1269
        %v1296 = vunpack.c.l.b16 %v1270
        %v1297 = vunpack.c.l.b16 %v1271
        %v1298 = vunpack.c.l.b16 %v1272
        %v1299 = vpack.c.b16 %v1292, %v1291
        %v1300 = vpack.c.b16 %v1294, %v1293
        %v1301 = vpack.c.b16 %v1296, %v1295
        %v1302 = vpack.c.b16 %v1298, %v1297
        %v1304 = vsel %vm266, %v1299, 0
        %v1307 = vsel %vm266, %v1300, 0
        %v1310 = vsel %vm266, %v1301, 0
        %v1313 = vsel %vm266, %v1302, 0
        %v1316 = vsel %vm279, %v1282, 0
        %1318 = vmatprep.subr.bf16.mxu0 0
        %1319 = vmatpush1.bf16.msra.mxu0 %v1316
        %1320 = vmatprep.subr.bf16.mxu0 0
        %1321 = vmatpush1.bf16.msra.mxu0 0
        %1322 = vmatprep.subr.bf16.mxu0 0
        %1323 = vmatpush1.bf16.msra.mxu0 0
        %1324 = vmatprep.subr.bf16.mxu0 0
        %1325 = vmatpush1.bf16.msra.mxu0 0
        %1326 = vmatprep.subr.bf16.mxu0 0
        %1327 = vmatpush1.bf16.msra.mxu0 0
        %1328 = vmatprep.subr.bf16.mxu0 0
        %1329 = vmatpush1.bf16.msra.mxu0 0
        %1330 = vmatprep.subr.bf16.mxu0 0
        %1331 = vmatpush1.bf16.msra.mxu0 0
        %1332 = vmatprep.subr.bf16.mxu0 0
        %1333 = vmatpush1.bf16.msra.mxu0 0
        %1334 = vmatprep.subr.bf16.mxu0 0
        %1335 = vmatpush1.bf16.msra.mxu0 0
        %1336 = vmatprep.subr.bf16.mxu0 0
        %1337 = vmatpush1.bf16.msra.mxu0 0
        %1338 = vmatprep.subr.bf16.mxu0 0
        %1339 = vmatpush1.bf16.msra.mxu0 0
        %1340 = vmatprep.subr.bf16.mxu0 0
        %1341 = vmatpush1.bf16.msra.mxu0 0
        %1342 = vmatprep.subr.bf16.mxu0 0
        %1343 = vmatpush1.bf16.msra.mxu0 0
        %1344 = vmatprep.subr.bf16.mxu0 0
        %1345 = vmatpush1.bf16.msra.mxu0 0
        %1346 = vmatprep.subr.bf16.mxu0 0
        %1347 = vmatpush1.bf16.msra.mxu0 0
        %1348 = vmatprep.subr.bf16.mxu0 0
        %1349 = vmatpush1.bf16.msra.mxu0 0
        %1350 = vmatprep.mubr.bf16.mxu0 0
        %1351 = vmatmul.mubr.bf16.gmra.mrb[0].mxu0 %v1304
        %v1352 = vpop.f32.mrb[0].mxu0
        %v1353 = vadd.f32 0.0, %v1352
        %v1354 = vpop.f32.mrb[0].mxu0
        %v1355 = vpop.f32.mrb[0].mxu0
        %v1356 = vadd.f32 0.0, %v1355
        %v1357 = vpop.f32.mrb[0].mxu0
        %1358 = vmatprep.mubr.bf16.mxu0 0
        %1359 = vmatmul.mubr.bf16.gmra.mrb[0].mxu0 %v1307
        %v1360 = vpop.f32.mrb[0].mxu0
        %v1361 = vadd.f32 0.0, %v1360
        %v1362 = vpop.f32.mrb[0].mxu0
        %v1363 = vpop.f32.mrb[0].mxu0
        %v1364 = vadd.f32 0.0, %v1363
        %v1365 = vpop.f32.mrb[0].mxu0
        %1366 = vmatprep.mubr.bf16.mxu0 0
        %1367 = vmatmul.mubr.bf16.gmra.mrb[0].mxu0 %v1310
        %v1368 = vpop.f32.mrb[0].mxu0
        %v1369 = vadd.f32 0.0, %v1368
        %v1370 = vpop.f32.mrb[0].mxu0
        %v1371 = vpop.f32.mrb[0].mxu0
        %v1372 = vadd.f32 0.0, %v1371
        %v1373 = vpop.f32.mrb[0].mxu0
        %1374 = vmatprep.mubr.bf16.mxu0 0
        %1375 = vmatmul.mubr.bf16.gmra.mrb[0].mxu0 %v1313
        %v1376 = vpop.f32.mrb[0].mxu0
        %v1377 = vadd.f32 0.0, %v1376
        %v1378 = vpop.f32.mrb[0].mxu0
        %v1379 = vpop.f32.mrb[0].mxu0
        %v1380 = vadd.f32 0.0, %v1379
        %v1381 = vpop.f32.mrb[0].mxu0
        %1382 = vdwg.mxu0
        %v1383 = vadd.f32 %v1273, %v1353
        %v1384 = vadd.f32 %v1274, %v1356
        %v1385 = vadd.f32 %v1275, %v1361
        %v1386 = vadd.f32 %v1276, %v1364
        %v1387 = vadd.f32 %v1277, %v1369
        %v1388 = vadd.f32 %v1278, %v1372
        %v1389 = vadd.f32 %v1279, %v1377
        %v1390 = vadd.f32 %v1280, %v1380
        %1391 = vst.msk [vmem:[#allocation2] sm:$0xff] %vm220, %v1383
        %1392 = vst.msk [vmem:[#allocation2 + $0x8] sm:$0xff] %vm220, %v1384
        %1393 = vst.msk [vmem:[#allocation2 + $0x10] sm:$0xff] %vm220, %v1385
        %1394 = vst.msk [vmem:[#allocation2 + $0x18] sm:$0xff] %vm220, %v1386
        %1395 = vst.msk [vmem:[#allocation2 + $0x20] sm:$0xff] %vm220, %v1387
        %1396 = vst.msk [vmem:[#allocation2 + $0x28] sm:$0xff] %vm220, %v1388
        %1397 = vst.msk [vmem:[#allocation2 + $0x30] sm:$0xff] %vm220, %v1389
        %1398 = vst.msk [vmem:[#allocation2 + $0x38] sm:$0xff] %vm220, %v1390
        %s1399 = scalar_lea.vmem %s210, 80
        %v1400 = vld [vmem:[%s1399] sm:$0xf]
        %v1401 = vld [vmem:[%s1399 + $0x8] sm:$0xf]
        %v1402 = vld [vmem:[%s1399 + $0x10] sm:$0xf]
        %v1403 = vld [vmem:[%s1399 + $0x18] sm:$0xf]
        %v1404 = vld [vmem:[%s1399 + $0x20] sm:$0xf]
        %v1405 = vld [vmem:[%s1399 + $0x28] sm:$0xf]
        %v1406 = vld [vmem:[%s1399 + $0x30] sm:$0xf]
        %v1407 = vld [vmem:[%s1399 + $0x38] sm:$0xf]
        %v1408 = vld [vmem:[#allocation2] sm:$0xff]
        %v1409 = vld [vmem:[#allocation2 + $0x8] sm:$0xff]
        %v1410 = vld [vmem:[#allocation2 + $0x10] sm:$0xff]
        %v1411 = vld [vmem:[#allocation2 + $0x18] sm:$0xff]
        %v1412 = vld [vmem:[#allocation2 + $0x20] sm:$0xff]
        %v1413 = vld [vmem:[#allocation2 + $0x28] sm:$0xff]
        %v1414 = vld [vmem:[#allocation2 + $0x30] sm:$0xff]
        %v1415 = vld [vmem:[#allocation2 + $0x38] sm:$0xff]
        %s1416 = scalar_lea.vmem %s215, 14
        %v1417 = vld [vmem:[%s1416] sm:$0x3]
        %v1426 = vunpack.c.l.b16 %v1400
        %v1427 = vunpack.c.l.b16 %v1401
        %v1428 = vunpack.c.l.b16 %v1402
        %v1429 = vunpack.c.l.b16 %v1403
        %v1430 = vunpack.c.l.b16 %v1404
        %v1431 = vunpack.c.l.b16 %v1405
        %v1432 = vunpack.c.l.b16 %v1406
        %v1433 = vunpack.c.l.b16 %v1407
        %v1434 = vpack.c.b16 %v1427, %v1426
        %v1435 = vpack.c.b16 %v1429, %v1428
        %v1436 = vpack.c.b16 %v1431, %v1430
        %v1437 = vpack.c.b16 %v1433, %v1432
        %v1439 = vsel %vm266, %v1434, 0
        %v1442 = vsel %vm266, %v1435, 0
        %v1445 = vsel %vm266, %v1436, 0
        %v1448 = vsel %vm266, %v1437, 0
        %v1451 = vsel %vm279, %v1417, 0
        %1453 = vmatprep.subr.bf16.mxu0 0
        %1454 = vmatpush1.bf16.msra.mxu0 %v1451
        %1455 = vmatprep.subr.bf16.mxu0 0
        %1456 = vmatpush1.bf16.msra.mxu0 0
        %1457 = vmatprep.subr.bf16.mxu0 0
        %1458 = vmatpush1.bf16.msra.mxu0 0
        %1459 = vmatprep.subr.bf16.mxu0 0
        %1460 = vmatpush1.bf16.msra.mxu0 0
        %1461 = vmatprep.subr.bf16.mxu0 0
        %1462 = vmatpush1.bf16.msra.mxu0 0
        %1463 = vmatprep.subr.bf16.mxu0 0
        %1464 = vmatpush1.bf16.msra.mxu0 0
        %1465 = vmatprep.subr.bf16.mxu0 0
        %1466 = vmatpush1.bf16.msra.mxu0 0
        %1467 = vmatprep.subr.bf16.mxu0 0
        %1468 = vmatpush1.bf16.msra.mxu0 0
        %1469 = vmatprep.subr.bf16.mxu0 0
        %1470 = vmatpush1.bf16.msra.mxu0 0
        %1471 = vmatprep.subr.bf16.mxu0 0
        %1472 = vmatpush1.bf16.msra.mxu0 0
        %1473 = vmatprep.subr.bf16.mxu0 0
        %1474 = vmatpush1.bf16.msra.mxu0 0
        %1475 = vmatprep.subr.bf16.mxu0 0
        %1476 = vmatpush1.bf16.msra.mxu0 0
        %1477 = vmatprep.subr.bf16.mxu0 0
        %1478 = vmatpush1.bf16.msra.mxu0 0
        %1479 = vmatprep.subr.bf16.mxu0 0
        %1480 = vmatpush1.bf16.msra.mxu0 0
        %1481 = vmatprep.subr.bf16.mxu0 0
        %1482 = vmatpush1.bf16.msra.mxu0 0
        %1483 = vmatprep.subr.bf16.mxu0 0
        %1484 = vmatpush1.bf16.msra.mxu0 0
        %1485 = vmatprep.mubr.bf16.mxu0 0
        %1486 = vmatmul.mubr.bf16.gmra.mrb[0].mxu0 %v1439
        %v1487 = vpop.f32.mrb[0].mxu0
        %v1488 = vadd.f32 0.0, %v1487
        %v1489 = vpop.f32.mrb[0].mxu0
        %v1490 = vpop.f32.mrb[0].mxu0
        %v1491 = vadd.f32 0.0, %v1490
        %v1492 = vpop.f32.mrb[0].mxu0
        %1493 = vmatprep.mubr.bf16.mxu0 0
        %1494 = vmatmul.mubr.bf16.gmra.mrb[0].mxu0 %v1442
        %v1495 = vpop.f32.mrb[0].mxu0
        %v1496 = vadd.f32 0.0, %v1495
        %v1497 = vpop.f32.mrb[0].mxu0
        %v1498 = vpop.f32.mrb[0].mxu0
        %v1499 = vadd.f32 0.0, %v1498
        %v1500 = vpop.f32.mrb[0].mxu0
        %1501 = vmatprep.mubr.bf16.mxu0 0
        %1502 = vmatmul.mubr.bf16.gmra.mrb[0].mxu0 %v1445
        %v1503 = vpop.f32.mrb[0].mxu0
        %v1504 = vadd.f32 0.0, %v1503
        %v1505 = vpop.f32.mrb[0].mxu0
        %v1506 = vpop.f32.mrb[0].mxu0
        %v1507 = vadd.f32 0.0, %v1506
        %v1508 = vpop.f32.mrb[0].mxu0
        %1509 = vmatprep.mubr.bf16.mxu0 0
        %1510 = vmatmul.mubr.bf16.gmra.mrb[0].mxu0 %v1448
        %v1511 = vpop.f32.mrb[0].mxu0
        %v1512 = vadd.f32 0.0, %v1511
        %v1513 = vpop.f32.mrb[0].mxu0
        %v1514 = vpop.f32.mrb[0].mxu0
        %v1515 = vadd.f32 0.0, %v1514
        %v1516 = vpop.f32.mrb[0].mxu0
        %1517 = vdwg.mxu0
        %v1518 = vadd.f32 %v1408, %v1488
        %v1519 = vadd.f32 %v1409, %v1491
        %v1520 = vadd.f32 %v1410, %v1496
        %v1521 = vadd.f32 %v1411, %v1499
        %v1522 = vadd.f32 %v1412, %v1504
        %v1523 = vadd.f32 %v1413, %v1507
        %v1524 = vadd.f32 %v1414, %v1512
        %v1525 = vadd.f32 %v1415, %v1515
        %1526 = vst.msk [vmem:[#allocation2] sm:$0xff] %vm220, %v1518
        %1527 = vst.msk [vmem:[#allocation2 + $0x8] sm:$0xff] %vm220, %v1519
        %1528 = vst.msk [vmem:[#allocation2 + $0x10] sm:$0xff] %vm220, %v1520
        %1529 = vst.msk [vmem:[#allocation2 + $0x18] sm:$0xff] %vm220, %v1521
        %1530 = vst.msk [vmem:[#allocation2 + $0x20] sm:$0xff] %vm220, %v1522
        %1531 = vst.msk [vmem:[#allocation2 + $0x28] sm:$0xff] %vm220, %v1523
        %1532 = vst.msk [vmem:[#allocation2 + $0x30] sm:$0xff] %vm220, %v1524
        %1533 = vst.msk [vmem:[#allocation2 + $0x38] sm:$0xff] %vm220, %v1525
        %v1534 = vld [vmem:[%s1264] sm:$0xf]
        %v1535 = vld [vmem:[%s1264 + $0x4] sm:$0x1]
        %v1536 = vld [vmem:[%s1264 + $0x8] sm:$0xf]
        %v1537 = vld [vmem:[%s1264 + $0xc] sm:$0x1]
        %v1538 = vld [vmem:[%s1264 + $0x10] sm:$0xf]
        %v1539 = vld [vmem:[%s1264 + $0x14] sm:$0x1]
        %v1540 = vld [vmem:[%s1264 + $0x18] sm:$0xf]
        %v1541 = vld [vmem:[%s1264 + $0x1c] sm:$0x1]
        %v1542 = vld [vmem:[%s1264 + $0x20] sm:$0xf]
        %v1543 = vld [vmem:[%s1264 + $0x24] sm:$0x1]
        %v1544 = vld [vmem:[%s1264 + $0x28] sm:$0xf]
        %v1545 = vld [vmem:[%s1264 + $0x2c] sm:$0x1]
        %v1546 = vld [vmem:[%s1264 + $0x30] sm:$0xf]
        %v1547 = vld [vmem:[%s1264 + $0x34] sm:$0x1]
        %v1548 = vld [vmem:[%s1264 + $0x38] sm:$0xf]
        %v1549 = vld [vmem:[%s1264 + $0x3c] sm:$0x1]
        %v1551 = vshrl.u32 %v1534, 16
        %v1553 = vrot.slane %v1551, 4
        %v1554 = vshll.u32 %v1534, 16
        %v1556 = vrot.slane %v1554, 5
        %v1557 = vor.u32 %v1553, %v1556
        %v1558 = vrot.slane %v1557, 4
        %v1560 = vshll.u32 %v1535, 16
        %v1562 = vrot.slane %v1560, 5
        %v1563 = vsel %vm517, %v1558, %v1562
        %v1565 = vshrl.u32 %v1536, 16
        %v1567 = vrot.slane %v1565, 4
        %v1568 = vshll.u32 %v1536, 16
        %v1570 = vrot.slane %v1568, 5
        %v1571 = vor.u32 %v1567, %v1570
        %v1572 = vrot.slane %v1571, 4
        %v1574 = vshll.u32 %v1537, 16
        %v1576 = vrot.slane %v1574, 5
        %v1577 = vsel %vm517, %v1572, %v1576
        %v1579 = vshrl.u32 %v1538, 16
        %v1581 = vrot.slane %v1579, 4
        %v1582 = vshll.u32 %v1538, 16
        %v1584 = vrot.slane %v1582, 5
        %v1585 = vor.u32 %v1581, %v1584
        %v1586 = vrot.slane %v1585, 4
        %v1588 = vshll.u32 %v1539, 16
        %v1590 = vrot.slane %v1588, 5
        %v1591 = vsel %vm517, %v1586, %v1590
        %v1593 = vshrl.u32 %v1540, 16
        %v1595 = vrot.slane %v1593, 4
        %v1596 = vshll.u32 %v1540, 16
        %v1598 = vrot.slane %v1596, 5
        %v1599 = vor.u32 %v1595, %v1598
        %v1600 = vrot.slane %v1599, 4
        %v1602 = vshll.u32 %v1541, 16
        %v1604 = vrot.slane %v1602, 5
        %v1605 = vsel %vm517, %v1600, %v1604
        %v1607 = vshrl.u32 %v1542, 16
        %v1609 = vrot.slane %v1607, 4
        %v1610 = vshll.u32 %v1542, 16
        %v1612 = vrot.slane %v1610, 5
        %v1613 = vor.u32 %v1609, %v1612
        %v1614 = vrot.slane %v1613, 4
        %v1616 = vshll.u32 %v1543, 16
        %v1618 = vrot.slane %v1616, 5
        %v1619 = vsel %vm517, %v1614, %v1618
        %v1621 = vshrl.u32 %v1544, 16
        %v1623 = vrot.slane %v1621, 4
        %v1624 = vshll.u32 %v1544, 16
        %v1626 = vrot.slane %v1624, 5
        %v1627 = vor.u32 %v1623, %v1626
        %v1628 = vrot.slane %v1627, 4
        %v1630 = vshll.u32 %v1545, 16
        %v1632 = vrot.slane %v1630, 5
        %v1633 = vsel %vm517, %v1628, %v1632
        %v1635 = vshrl.u32 %v1546, 16
        %v1637 = vrot.slane %v1635, 4
        %v1638 = vshll.u32 %v1546, 16
        %v1640 = vrot.slane %v1638, 5
        %v1641 = vor.u32 %v1637, %v1640
        %v1642 = vrot.slane %v1641, 4
        %v1644 = vshll.u32 %v1547, 16
        %v1646 = vrot.slane %v1644, 5
        %v1647 = vsel %vm517, %v1642, %v1646
        %v1649 = vshrl.u32 %v1548, 16
        %v1651 = vrot.slane %v1649, 4
        %v1652 = vshll.u32 %v1548, 16
        %v1654 = vrot.slane %v1652, 5
        %v1655 = vor.u32 %v1651, %v1654
        %v1656 = vrot.slane %v1655, 4
        %v1658 = vshll.u32 %v1549, 16
        %v1660 = vrot.slane %v1658, 5
        %v1661 = vsel %vm517, %v1656, %v1660
        %v1662 = vld [vmem:[#allocation2] sm:$0xff]
        %v1663 = vld [vmem:[#allocation2 + $0x8] sm:$0xff]
        %v1664 = vld [vmem:[#allocation2 + $0x10] sm:$0xff]
        %v1665 = vld [vmem:[#allocation2 + $0x18] sm:$0xff]
        %v1666 = vld [vmem:[#allocation2 + $0x20] sm:$0xff]
        %v1667 = vld [vmem:[#allocation2 + $0x28] sm:$0xff]
        %v1668 = vld [vmem:[#allocation2 + $0x30] sm:$0xff]
        %v1669 = vld [vmem:[#allocation2 + $0x38] sm:$0xff]
        %s1670 = scalar_lea.vmem %s215, 16
        %v1671 = vld [vmem:[%s1670] sm:$0x3]
        %v1672 = vunpack.c.l.b16 %v1563
        %v1673 = vunpack.c.l.b16 %v1577
        %v1674 = vunpack.c.l.b16 %v1591
        %v1675 = vunpack.c.l.b16 %v1605
        %v1676 = vunpack.c.l.b16 %v1619
        %v1677 = vunpack.c.l.b16 %v1633
        %v1678 = vunpack.c.l.b16 %v1647
        %v1679 = vunpack.c.l.b16 %v1661
        %v1680 = vpack.c.b16 %v1673, %v1672
        %v1681 = vpack.c.b16 %v1675, %v1674
        %v1682 = vpack.c.b16 %v1677, %v1676
        %v1683 = vpack.c.b16 %v1679, %v1678
        %v1685 = vsel %vm266, %v1680, 0
        %v1688 = vsel %vm266, %v1681, 0
        %v1691 = vsel %vm266, %v1682, 0
        %v1694 = vsel %vm266, %v1683, 0
        %v1697 = vsel %vm279, %v1671, 0
        %1699 = vmatprep.subr.bf16.mxu0 0
        %1700 = vmatpush1.bf16.msra.mxu0 %v1697
        %1701 = vmatprep.subr.bf16.mxu0 0
        %1702 = vmatpush1.bf16.msra.mxu0 0
        %1703 = vmatprep.subr.bf16.mxu0 0
        %1704 = vmatpush1.bf16.msra.mxu0 0
        %1705 = vmatprep.subr.bf16.mxu0 0
        %1706 = vmatpush1.bf16.msra.mxu0 0
        %1707 = vmatprep.subr.bf16.mxu0 0
        %1708 = vmatpush1.bf16.msra.mxu0 0
        %1709 = vmatprep.subr.bf16.mxu0 0
        %1710 = vmatpush1.bf16.msra.mxu0 0
        %1711 = vmatprep.subr.bf16.mxu0 0
        %1712 = vmatpush1.bf16.msra.mxu0 0
        %1713 = vmatprep.subr.bf16.mxu0 0
        %1714 = vmatpush1.bf16.msra.mxu0 0
        %1715 = vmatprep.subr.bf16.mxu0 0
        %1716 = vmatpush1.bf16.msra.mxu0 0
        %1717 = vmatprep.subr.bf16.mxu0 0
        %1718 = vmatpush1.bf16.msra.mxu0 0
        %1719 = vmatprep.subr.bf16.mxu0 0
        %1720 = vmatpush1.bf16.msra.mxu0 0
        %1721 = vmatprep.subr.bf16.mxu0 0
        %1722 = vmatpush1.bf16.msra.mxu0 0
        %1723 = vmatprep.subr.bf16.mxu0 0
        %1724 = vmatpush1.bf16.msra.mxu0 0
        %1725 = vmatprep.subr.bf16.mxu0 0
        %1726 = vmatpush1.bf16.msra.mxu0 0
        %1727 = vmatprep.subr.bf16.mxu0 0
        %1728 = vmatpush1.bf16.msra.mxu0 0
        %1729 = vmatprep.subr.bf16.mxu0 0
        %1730 = vmatpush1.bf16.msra.mxu0 0
        %1731 = vmatprep.mubr.bf16.mxu0 0
        %1732 = vmatmul.mubr.bf16.gmra.mrb[0].mxu0 %v1685
        %v1733 = vpop.f32.mrb[0].mxu0
        %v1734 = vadd.f32 0.0, %v1733
        %v1735 = vpop.f32.mrb[0].mxu0
        %v1736 = vpop.f32.mrb[0].mxu0
        %v1737 = vadd.f32 0.0, %v1736
        %v1738 = vpop.f32.mrb[0].mxu0
        %1739 = vmatprep.mubr.bf16.mxu0 0
        %1740 = vmatmul.mubr.bf16.gmra.mrb[0].mxu0 %v1688
        %v1741 = vpop.f32.mrb[0].mxu0
        %v1742 = vadd.f32 0.0, %v1741
        %v1743 = vpop.f32.mrb[0].mxu0
        %v1744 = vpop.f32.mrb[0].mxu0
        %v1745 = vadd.f32 0.0, %v1744
        %v1746 = vpop.f32.mrb[0].mxu0
        %1747 = vmatprep.mubr.bf16.mxu0 0
        %1748 = vmatmul.mubr.bf16.gmra.mrb[0].mxu0 %v1691
        %v1749 = vpop.f32.mrb[0].mxu0
        %v1750 = vadd.f32 0.0, %v1749
        %v1751 = vpop.f32.mrb[0].mxu0
        %v1752 = vpop.f32.mrb[0].mxu0
        %v1753 = vadd.f32 0.0, %v1752
        %v1754 = vpop.f32.mrb[0].mxu0
        %1755 = vmatprep.mubr.bf16.mxu0 0
        %1756 = vmatmul.mubr.bf16.gmra.mrb[0].mxu0 %v1694
        %v1757 = vpop.f32.mrb[0].mxu0
        %v1758 = vadd.f32 0.0, %v1757
        %v1759 = vpop.f32.mrb[0].mxu0
        %v1760 = vpop.f32.mrb[0].mxu0
        %v1761 = vadd.f32 0.0, %v1760
        %v1762 = vpop.f32.mrb[0].mxu0
        %1763 = vdwg.mxu0
        %v1764 = vadd.f32 %v1662, %v1734
        %v1765 = vadd.f32 %v1663, %v1737
        %v1766 = vadd.f32 %v1664, %v1742
        %v1767 = vadd.f32 %v1665, %v1745
        %v1768 = vadd.f32 %v1666, %v1750
        %v1769 = vadd.f32 %v1667, %v1753
        %v1770 = vadd.f32 %v1668, %v1758
        %v1771 = vadd.f32 %v1669, %v1761
        %1772 = vst.msk [vmem:[#allocation2] sm:$0xff] %vm220, %v1764
        %1773 = vst.msk [vmem:[#allocation2 + $0x8] sm:$0xff] %vm220, %v1765
        %1774 = vst.msk [vmem:[#allocation2 + $0x10] sm:$0xff] %vm220, %v1766
        %1775 = vst.msk [vmem:[#allocation2 + $0x18] sm:$0xff] %vm220, %v1767
        %1776 = vst.msk [vmem:[#allocation2 + $0x20] sm:$0xff] %vm220, %v1768
        %1777 = vst.msk [vmem:[#allocation2 + $0x28] sm:$0xff] %vm220, %v1769
        %1778 = vst.msk [vmem:[#allocation2 + $0x30] sm:$0xff] %vm220, %v1770
        %1779 = vst.msk [vmem:[#allocation2 + $0x38] sm:$0xff] %vm220, %v1771
        %v1780 = vld [vmem:[#allocation2] sm:$0xff]
        %v1781 = vld [vmem:[#allocation2 + $0x8] sm:$0xff]
        %v1782 = vld [vmem:[#allocation2 + $0x10] sm:$0xff]
        %v1783 = vld [vmem:[#allocation2 + $0x18] sm:$0xff]
        %v1784 = vld [vmem:[#allocation2 + $0x20] sm:$0xff]
        %v1785 = vld [vmem:[#allocation2 + $0x28] sm:$0xff]
        %v1786 = vld [vmem:[#allocation2 + $0x30] sm:$0xff]
        %v1787 = vld [vmem:[#allocation2 + $0x38] sm:$0xff]
        %v1788 = vld [vmem:[%s218] sm:$0x1]
        %v1790 = vlaneseq
        %v1791 = vshrl.u32 %v1790, 7
        %v1792 = vsub.s32 0, %v1791
        %v1793 = vrot.slane %v1788, %v1792
        %v1795 = vadd.f32 %v1780, %v1793
        %v1796 = vadd.f32 %v1781, %v1793
        %v1797 = vadd.f32 %v1782, %v1793
        %v1798 = vadd.f32 %v1783, %v1793
        %v1799 = vadd.f32 %v1784, %v1793
        %v1800 = vadd.f32 %v1785, %v1793
        %v1801 = vadd.f32 %v1786, %v1793
        %v1802 = vadd.f32 %v1787, %v1793
        %v1803 = vmax.f32 %v1795, 0.0
        %v1804 = vmax.f32 %v1796, 0.0
        %v1805 = vmax.f32 %v1797, 0.0
        %v1806 = vmax.f32 %v1798, 0.0
        %v1807 = vmax.f32 %v1799, 0.0
        %v1808 = vmax.f32 %v1800, 0.0
        %v1809 = vmax.f32 %v1801, 0.0
        %v1810 = vmax.f32 %v1802, 0.0
        %1811 = vst.msk [vmem:[%s204] sm:$0xff] %vm220, %v1803
        %1812 = vst.msk [vmem:[%s204 + $0x8] sm:$0xff] %vm220, %v1804
        %1813 = vst.msk [vmem:[%s204 + $0x10] sm:$0xff] %vm220, %v1805
        %1814 = vst.msk [vmem:[%s204 + $0x18] sm:$0xff] %vm220, %v1806
        %1815 = vst.msk [vmem:[%s204 + $0x20] sm:$0xff] %vm220, %v1807
        %1816 = vst.msk [vmem:[%s204 + $0x28] sm:$0xff] %vm220, %v1808
        %1817 = vst.msk [vmem:[%s204 + $0x30] sm:$0xff] %vm220, %v1809
        %1818 = vst.msk [vmem:[%s204 + $0x38] sm:$0xff] %vm220, %v1810
        %s1819 = sand.u32 %s117, 1
        %s1820 = scalar_lea.sflag [#allocation4], %s1819
        %s1821 = sand.u32 %s117, 1
        %s1822 = smul.addr %s1821, 64
        %s1823 = scalar_lea.vmem [#allocation3], %s1822
        // Predicated region
        $region33: #{down_forward.1} parent=31 // pred_check
          %p1824 = pneg %p127
        $region34: #{down_forward.1} parent=31 // pred_check_branch
          %1826 = sbr.rel (%p1824) target = $region36
        $region35: #{down_forward.1} parent=31 // pred_region
          %s1828 = ssub.s32 1024, 1024
          %1829 = vsyncadd %s1820, %s1828
          %s1830 = smul.addr %s21, 8
          %s1831 = sadd.s32 %s22, %s1830
          %s1832 = smul.addr %s1831, 128
          %s1833 = scalar_lea.hbm %s3, %s1832
          %s1834 = sshll.u32 %s1823, 4
          %s1835 = int_to_ptr.vmem [resolvable:$true] %s1834
          %1840 = dma.vmem_to_hbm [thread:$0]  %s1835, 1024, %s1833, %s1820, 128, 128, 8
        $region36: #{down_forward.1} parent=31 // pred_fallthru
          _
      $region32: #{down_forward.1} parent=5 // pred_fallthru
        _
      %p1841 = scmp.le.s32.totalorder 2, %s12
      // Predicated region
      $region37: #{down_forward.1} parent=5 // pred_check
        %p1842 = pneg %p1841
      $region38: #{down_forward.1} parent=5 // pred_check_branch
        %1844 = sbr.rel (%p1842) target = $region40
      $region39: #{down_forward.1} parent=5 // pred_region
        %s1845 = ssub.s32 %s12, 2
        // Predicated region
        $region41: #{down_forward.1} parent=39 // pred_check
          %p1846 = pneg %p133
        $region42: #{down_forward.1} parent=39 // pred_check_branch
          %1848 = sbr.rel (%p1846) target = $region44
        $region43: #{down_forward.1} parent=39 // pred_region
          %s1849 = sand.u32 %s118, 1
          %s1850 = scalar_lea.sflag [#allocation4], %s1849
          %s1851 = sand.u32 %s118, 1
          %s1852 = smul.addr %s1851, 64
          %s1853 = scalar_lea.vmem [#allocation3], %s1852
          %1854 = dma.done %s1850, 1024
        $region44: #{down_forward.1} parent=39 // pred_fallthru
          _
      $region40: #{down_forward.1} parent=5 // pred_fallthru
        _
    $region6: #{down_forward.1} parent=1 // loop_footer
      %s16 = sadd.s32 1, %s12
    $region7: #{down_forward.1} parent=1 // loop_footer_branch
      %11 = sbr.rel target = $region3
    $region8: #{down_forward.1} parent=1 // loop_exit
      _
    %1855 = vsyncpa [#allocation4], 1
    %s1856 = scalar_lea.sflag [#allocation4], 1
    %1857 = vsyncpa %s1856, 1

</llo_original>
